<compile_context>
chip_gen: v7x
topology: tpu7x:2x2x1
jax: 0.10.0
libtpu: 0.0.40
codegen_flags: <defaults>
</compile_context>

<pallas_src>
import jax
import jax.numpy as jnp
from jax.experimental import pallas as pl
from jax.experimental.pallas import tpu as pltpu

IN_FEATS = 28 * 28          # 784
K_PAD = 896                 # 7 * 128  (lane-aligned contraction for matmul #1)
HIDDEN = 512
OUT_FEATS = 10
OUT_PAD = 128               # lane-dense output width


def _round_up(x, m):
    return ((x + m - 1) // m) * m


def mlp_kernel(x_ref, w1_ref, b1_ref, w2_ref, b2_ref, w3_ref, b3_ref, o_ref):
    # x: bf16 [TB, 896]   w1: bf16 [896, 512]   w2: bf16 [512, 512]
    # w3: bf16 [512, 128] b*: f32              o: f32 [TB, 128]
    x = x_ref[...]
    h1 = jnp.dot(x, w1_ref[...], preferred_element_type=jnp.float32) + b1_ref[...]
    h1 = jnp.maximum(h1, 0.0).astype(jnp.bfloat16)
    h2 = jnp.dot(h1, w2_ref[...], preferred_element_type=jnp.float32) + b2_ref[...]
    h2 = jnp.maximum(h2, 0.0).astype(jnp.bfloat16)
    logits = jnp.dot(h2, w3_ref[...], preferred_element_type=jnp.float32) + b3_ref[...]
    o_ref[...] = logits.astype(o_ref.dtype)


def my_neural_network_forward(x, params, *, block_b=256):
    """x: [B, 28, 28] float32 -> logits [B, 10] float32."""
    w1, b1, w2, b2, w3, b3 = params
    B = x.shape[0]

    # Batch tile: multiple of 8 sublanes; default 256 rows to keep the MXU fed.
    TB = min(block_b, _round_up(B, 8))
    TB = _round_up(TB, 8)
    B_pad = _round_up(B, TB)
    grid = (B_pad // TB,)

    # --- wrapper-side prep (padding + one-time bf16 casts) ---------------
    x_flat = x.reshape(B, IN_FEATS)                                   # nn.Flatten
    x_p = jnp.pad(x_flat, ((0, B_pad - B), (0, K_PAD - IN_FEATS))
                  ).astype(jnp.bfloat16)                              # [B_pad, 896]
    w1_p = jnp.pad(w1, ((0, K_PAD - IN_FEATS), (0, 0))).astype(jnp.bfloat16)
    w2_p = w2.astype(jnp.bfloat16)
    w3_p = jnp.pad(w3, ((0, 0), (0, OUT_PAD - OUT_FEATS))).astype(jnp.bfloat16)
    b3_p = jnp.pad(b3, ((0, 0), (0, OUT_PAD - OUT_FEATS)))            # f32 [1,128]

    resident = lambda shape: pl.BlockSpec(shape, lambda i: tuple(0 for _ in shape))

    flops = 2 * B_pad * (K_PAD * HIDDEN + HIDDEN * HIDDEN + HIDDEN * OUT_PAD)
    bytes_accessed = (x_p.size * 2 + w1_p.size * 2 + w2_p.size * 2 + w3_p.size * 2
                      + b1.size * 4 + b2.size * 4 + b3_p.size * 4
                      + B_pad * OUT_PAD * 4)

    out = pl.pallas_call(
        mlp_kernel,
        out_shape=jax.ShapeDtypeStruct((B_pad, OUT_PAD), jnp.float32),
        grid=grid,
        in_specs=[
            pl.BlockSpec((TB, K_PAD), lambda i: (i, 0)),   # x tile walks batch
            resident((K_PAD, HIDDEN)),                     # w1 resident
            resident((1, HIDDEN)),                         # b1
            resident((HIDDEN, HIDDEN)),                    # w2
            resident((1, HIDDEN)),                         # b2
            resident((HIDDEN, OUT_PAD)),                   # w3 (padded to 128)
            resident((1, OUT_PAD)),                        # b3 (padded to 128)
        ],
        out_specs=pl.BlockSpec((TB, OUT_PAD), lambda i: (i, 0)),
        compiler_params=pltpu.CompilerParams(
            dimension_semantics=("parallel",)),
        cost_estimate=pl.CostEstimate(
            flops=flops, transcendentals=0, bytes_accessed=bytes_accessed),
    )(x_p, w1_p, b1, w2_p, b2, w3_p, b3_p)

    return out[:B, :OUT_FEATS]


def init_params(key):
    """Deterministic init mimicking nn.Linear default (uniform +/- 1/sqrt(fan_in))."""
    dims = [(IN_FEATS, HIDDEN), (HIDDEN, HIDDEN), (HIDDEN, OUT_FEATS)]
    params = []
    keys = jax.random.split(key, 2 * len(dims))
    for i, (fan_in, fan_out) in enumerate(dims):
        bound = 1.0 / (fan_in ** 0.5)
        w = jax.random.uniform(keys[2 * i], (fan_in, fan_out),
                               minval=-bound, maxval=bound, dtype=jnp.float32)
        b = jax.random.uniform(keys[2 * i + 1], (1, fan_out),
                               minval=-bound, maxval=bound, dtype=jnp.float32)
        params.extend([w, b])
    return tuple(params)


def reference_forward(x, params):
    w1, b1, w2, b2, w3, b3 = params
    h = x.reshape(x.shape[0], -1)
    h = jnp.maximum(h @ w1 + b1, 0.0)
    h = jnp.maximum(h @ w2 + b2, 0.0)
    return h @ w3 + b3


if __name__ == "__main__":
    key = jax.random.PRNGKey(0)
    k_x, k_p = jax.random.split(key)
    B = 32
    x = jax.random.normal(k_x, (B, 28, 28), dtype=jnp.float32)
    params = init_params(k_p)

    # Small batch tile so the test exercises a multi-step grid (grid=(4,));
    # production callers use the default block_b=256.
    logits = my_neural_network_forward(x, params, block_b=8)
    logits = jax.block_until_ready(logits)

    ref = reference_forward(x, params)
    assert logits.shape == (B, OUT_FEATS)
    # bf16 matmul operands (f32 accumulation) -> looser tolerance vs f32 reference.
    assert jnp.allclose(logits, ref, atol=5e-2, rtol=5e-2), \
        float(jnp.max(jnp.abs(logits - ref)))
    print("KERNEL_OK")
</pallas_src>

<mosaic_0001>
module attributes {stable_mosaic.version = 11 : i64} {
  func.func @mlp_kernel(%arg0: i32, %arg1: memref<8x896xbf16, #tpu.memory_space<vmem>>, %arg2: memref<896x512xbf16, #tpu.memory_space<vmem>>, %arg3: memref<1x512xf32, #tpu.memory_space<vmem>>, %arg4: memref<512x512xbf16, #tpu.memory_space<vmem>>, %arg5: memref<1x512xf32, #tpu.memory_space<vmem>>, %arg6: memref<512x128xbf16, #tpu.memory_space<vmem>>, %arg7: memref<1x128xf32, #tpu.memory_space<vmem>>, %arg8: memref<8x128xf32, #tpu.memory_space<vmem>>) attributes {dimension_semantics = [#tpu.dimension_semantics<parallel>], iteration_bounds = array<i64: 4>, scalar_prefetch = 0 : i64, scratch_operands = 0 : i64, tpu.core_type = #tpu.core_type<tc>, window_params = [{transform_indices = @transform_0, window_bounds = array<i64: 8, 896>}, {pipeline_mode = #tpu.pipeline_mode<synchronous>, transform_indices = @transform_1, window_bounds = array<i64: 896, 512>}, {pipeline_mode = #tpu.pipeline_mode<synchronous>, transform_indices = @transform_2, window_bounds = array<i64: 1, 512>}, {pipeline_mode = #tpu.pipeline_mode<synchronous>, transform_indices = @transform_3, window_bounds = array<i64: 512, 512>}, {pipeline_mode = #tpu.pipeline_mode<synchronous>, transform_indices = @transform_4, window_bounds = array<i64: 1, 512>}, {pipeline_mode = #tpu.pipeline_mode<synchronous>, transform_indices = @transform_5, window_bounds = array<i64: 512, 128>}, {pipeline_mode = #tpu.pipeline_mode<synchronous>, transform_indices = @transform_6, window_bounds = array<i64: 1, 128>}, {transform_indices = @transform_7, window_bounds = array<i64: 8, 128>}]} {
    %c0 = arith.constant 0 : index
    %c0_0 = arith.constant 0 : index
    %0 = vector.load %arg1[%c0, %c0_0] : memref<8x896xbf16, #tpu.memory_space<vmem>>, vector<8x896xbf16>
    %c0_1 = arith.constant 0 : index
    %c0_2 = arith.constant 0 : index
    %1 = vector.load %arg2[%c0_1, %c0_2] : memref<896x512xbf16, #tpu.memory_space<vmem>>, vector<896x512xbf16>
    %cst = arith.constant dense<0.000000e+00> : vector<8x512xf32>
    %2 = tpu.matmul %0, %1, %cst {dimension_numbers = #tpu.dot_dimension_numbers<[1], [0], [0], [1], [0, 0, 1, 1], [], []>} : vector<8x896xbf16>, vector<896x512xbf16>, vector<8x512xf32> -> vector<8x512xf32>
    %c0_3 = arith.constant 0 : index
    %c0_4 = arith.constant 0 : index
    %3 = vector.load %arg3[%c0_3, %c0_4] : memref<1x512xf32, #tpu.memory_space<vmem>>, vector<1x512xf32>
    %4 = vector.broadcast %3 : vector<1x512xf32> to vector<8x512xf32>
    %5 = arith.addf %2, %4 : vector<8x512xf32>
    %cst_5 = arith.constant 0.000000e+00 : f32
    %6 = vector.broadcast %cst_5 : f32 to vector<8x512xf32>
    %7 = arith.maximumf %5, %6 : vector<8x512xf32>
    %8 = arith.truncf %7 : vector<8x512xf32> to vector<8x512xbf16>
    %c0_6 = arith.constant 0 : index
    %c0_7 = arith.constant 0 : index
    %9 = vector.load %arg4[%c0_6, %c0_7] : memref<512x512xbf16, #tpu.memory_space<vmem>>, vector<512x512xbf16>
    %cst_8 = arith.constant dense<0.000000e+00> : vector<8x512xf32>
    %10 = tpu.matmul %8, %9, %cst_8 {dimension_numbers = #tpu.dot_dimension_numbers<[1], [0], [0], [1], [0, 0, 1, 1], [], []>} : vector<8x512xbf16>, vector<512x512xbf16>, vector<8x512xf32> -> vector<8x512xf32>
    %c0_9 = arith.constant 0 : index
    %c0_10 = arith.constant 0 : index
    %11 = vector.load %arg5[%c0_9, %c0_10] : memref<1x512xf32, #tpu.memory_space<vmem>>, vector<1x512xf32>
    %12 = vector.broadcast %11 : vector<1x512xf32> to vector<8x512xf32>
    %13 = arith.addf %10, %12 : vector<8x512xf32>
    %cst_11 = arith.constant 0.000000e+00 : f32
    %14 = vector.broadcast %cst_11 : f32 to vector<8x512xf32>
    %15 = arith.maximumf %13, %14 : vector<8x512xf32>
    %16 = arith.truncf %15 : vector<8x512xf32> to vector<8x512xbf16>
    %c0_12 = arith.constant 0 : index
    %c0_13 = arith.constant 0 : index
    %17 = vector.load %arg6[%c0_12, %c0_13] : memref<512x128xbf16, #tpu.memory_space<vmem>>, vector<512x128xbf16>
    %cst_14 = arith.constant dense<0.000000e+00> : vector<8x128xf32>
    %18 = tpu.matmul %16, %17, %cst_14 {dimension_numbers = #tpu.dot_dimension_numbers<[1], [0], [0], [1], [0, 0, 1, 1], [], []>} : vector<8x512xbf16>, vector<512x128xbf16>, vector<8x128xf32> -> vector<8x128xf32>
    %c0_15 = arith.constant 0 : index
    %c0_16 = arith.constant 0 : index
    %19 = vector.load %arg7[%c0_15, %c0_16] : memref<1x128xf32, #tpu.memory_space<vmem>>, vector<1x128xf32>
    %20 = vector.broadcast %19 : vector<1x128xf32> to vector<8x128xf32>
    %21 = arith.addf %18, %20 : vector<8x128xf32>
    %c0_17 = arith.constant 0 : index
    %c0_18 = arith.constant 0 : index
    %22 = vector.load %arg8[%c0_17, %c0_18] : memref<8x128xf32, #tpu.memory_space<vmem>>, vector<8x128xf32>
    tpu.vector_store %arg8[%c0_17, %c0_18], %21 {strides = array<i32>} : memref<8x128xf32, #tpu.memory_space<vmem>>, vector<8x128xf32>,
    return
  }
  func.func @transform_0(%arg0: i32) -> (i32, i32) {
    %c0_i32 = arith.constant 0 : i32
    %c0_i32_0 = arith.constant 0 : i32
    return %arg0, %c0_i32 : i32, i32
  }
  func.func @transform_1(%arg0: i32) -> (i32, i32) {
    %c0_i32 = arith.constant 0 : i32
    %c0_i32_0 = arith.constant 0 : i32
    %c0_i32_1 = arith.constant 0 : i32
    return %c0_i32, %c0_i32_0 : i32, i32
  }
  func.func @transform_2(%arg0: i32) -> (i32, i32) {
    %c0_i32 = arith.constant 0 : i32
    %c0_i32_0 = arith.constant 0 : i32
    %c0_i32_1 = arith.constant 0 : i32
    return %c0_i32, %c0_i32_0 : i32, i32
  }
  func.func @transform_3(%arg0: i32) -> (i32, i32) {
    %c0_i32 = arith.constant 0 : i32
    %c0_i32_0 = arith.constant 0 : i32
    %c0_i32_1 = arith.constant 0 : i32
    return %c0_i32, %c0_i32_0 : i32, i32
  }
  func.func @transform_4(%arg0: i32) -> (i32, i32) {
    %c0_i32 = arith.constant 0 : i32
    %c0_i32_0 = arith.constant 0 : i32
    %c0_i32_1 = arith.constant 0 : i32
    return %c0_i32, %c0_i32_0 : i32, i32
  }
  func.func @transform_5(%arg0: i32) -> (i32, i32) {
    %c0_i32 = arith.constant 0 : i32
    %c0_i32_0 = arith.constant 0 : i32
    %c0_i32_1 = arith.constant 0 : i32
    return %c0_i32, %c0_i32_0 : i32, i32
  }
  func.func @transform_6(%arg0: i32) -> (i32, i32) {
    %c0_i32 = arith.constant 0 : i32
    %c0_i32_0 = arith.constant 0 : i32
    %c0_i32_1 = arith.constant 0 : i32
    return %c0_i32, %c0_i32_0 : i32, i32
  }
  func.func @transform_7(%arg0: i32) -> (i32, i32) {
    %c0_i32 = arith.constant 0 : i32
    %c0_i32_0 = arith.constant 0 : i32
    return %arg0, %c0_i32 : i32, i32
  }
}

</mosaic_0001>

<llo_original>
// kernel: tpu_custom_call.1
$region0: #{tpu_custom_call.1}
  #allocation0 [shape = 'u32[]', space=smem, size = 0x4, offset = 0x4, fixed_abs, tag = 'smem constant byte address 0x4 - core index']
  #allocation1 [shape = 'u32[144,128]{1,0:T(1,128)}', space=vmem, size = 0x12000, scoped, tag = 'internal scratch']
  %s0 = inlined_call_operand.hbm [shape: bf16[32,896], index: 0, kind: input, shape index: {}]
  %s1 = inlined_call_operand.hbm [shape: bf16[896,512], index: 1, kind: input, shape index: {}]
  %s2 = inlined_call_operand.vmem [shape: f32[1,512], index: 2, kind: input, shape index: {}]
  %s3 = inlined_call_operand.hbm [shape: bf16[512,512], index: 3, kind: input, shape index: {}]
  %s4 = inlined_call_operand.vmem [shape: f32[1,512], index: 4, kind: input, shape index: {}]
  %s5 = inlined_call_operand.hbm [shape: bf16[512,128], index: 5, kind: input, shape index: {}]
  %s6 = inlined_call_operand.vmem [shape: f32[1,128], index: 6, kind: input, shape index: {}]
  %s7 = inlined_call_operand.hbm [shape: f32[32,128], index: 7, kind: output, shape index: {}]
  %s8 = sld [smem:[#allocation0]]
  $region77: #{tpu_custom_call.1} parent=0
    _
  %s10 = ssub.s32 1, %s8
  %s11 = scalar_select 0, %s10, %s8
  $region1: #{tpu_custom_call.1} parent=0
    #allocation2 [shape = 'u8[28672]{0}', space=vmem, size = 0x7000, scoped, tag = 'input window, operand 0']
    #allocation3 [shape = 's32[2]{0}', space=sflag, size = 0x8, scoped, tag = 'scoped memory for tpu_custom_call.1']
    #allocation4 [shape = 's32[2]{0}', space=sflag, size = 0x8, scoped, tag = 'scoped memory for tpu_custom_call.1']
    #allocation5 [shape = 'u8[917504]{0}', space=vmem, size = 0xe0000, scoped, tag = 'input window, operand 1, single buffered']
    #allocation6 [shape = 's32[1]{0}', space=sflag, size = 0x4, scoped, tag = 'scoped memory for tpu_custom_call.1']
    #allocation7 [shape = 'u8[524288]{0}', space=vmem, size = 0x80000, scoped, tag = 'input window, operand 3, single buffered']
    #allocation8 [shape = 'u8[131072]{0}', space=vmem, size = 0x20000, scoped, tag = 'input window, operand 5, single buffered']
    #allocation9 [shape = 's32[1]{0}', space=sflag, size = 0x4, scoped, tag = 'scoped memory for tpu_custom_call.1']
    #allocation10 [shape = 'u8[8192]{0}', space=vmem, size = 0x2000, scoped, tag = 'output window, operand 0']
    %12 = vsyncpa [#allocation3], 0
    %s13 = scalar_lea.sflag [#allocation3], 1
    %14 = vsyncpa %s13, 0
    %15 = vsyncpa [#allocation6], 0
    %16 = vsyncpa [#allocation9], 0
    %17 = vsyncpa [#allocation4], 0
    %s18 = scalar_lea.sflag [#allocation4], 1
    %19 = vsyncpa %s18, 0
    loop: start=0, step=1, limit=6
    $region2: #{tpu_custom_call.1} parent=1 // loop_pre_header
      _
    $region3: #{tpu_custom_call.1} parent=1 // loop_header
      %s21 = sphi 0, %s25
      %p22 = scmp.ge.s32.totalorder %s21, 6
      %s31 = sphi 0, %s33
      %s34 = sphi 0, %s31
      %s35 = sphi 0, %s34
      %s51 = sphi 0, %s35
      %s55 = sphi 0, %s55
      %s57 = sphi 0, %s55
      %s58 = sphi 0, %s57
      %s72 = sphi 0, %s58
      %s76 = sphi 0, %s76
      %s78 = sphi 0, %s76
      %s79 = sphi 0, %s78
      %s93 = sphi 0, %s79
      %s97 = sphi 0, %s97
      %s99 = sphi 0, %s97
      %s100 = sphi 0, %s99
      %s114 = sphi 0, %s100
      %s118 = sphi 0, %s118
      %s120 = sphi 0, %s118
      %s121 = sphi 0, %s120
      %s135 = sphi 0, %s121
      %s139 = sphi 0, %s139
      %s141 = sphi 0, %s139
      %s142 = sphi 0, %s141
      %s156 = sphi 0, %s142
      %s160 = sphi 0, %s160
      %s162 = sphi 0, %s160
      %s163 = sphi 0, %s162
      %s177 = sphi 0, %s163
      %s183 = sphi 0, %s185
      %s186 = sphi 0, %s183
      %s187 = sphi 0, %s186
      %s203 = sphi 0, %s187
    $region4: #{tpu_custom_call.1} parent=1 // loop_header_branch
      %24 = sbr.rel (%p22) target = $region8
    $region5: #{tpu_custom_call.1} parent=1 // loop_body
      %s26 = ssub.s32 %s21, 1
      %s27 = ssub.s32 %s21, 2
      %s28 = sadd.s32 %s21, 1
      %s29 = ssub.s32 %s21, %s28
      %p30 = scmp.eq.s32.totalorder %s29, 0
      %s32 = sadd.s32 %s31, 1
      %s33 = scalar_select %p30, %s31, %s32
      %p36 = pneg %p30
      %p37 = scmp.eq.s32.totalorder %s21, 3
      %p38 = por %p36, %p37
      %p39 = scmp.ne.s32.totalorder %s31, %s34
      %p40 = scmp.eq.s32.totalorder %s21, 0
      %p41 = por %p39, %p40
      %p42 = scmp.ne.s32.totalorder %s31, %s34
      %p43 = scmp.eq.s32.totalorder %s26, 3
      %p44 = por %p42, %p43
      %p45 = scmp.ne.s32.totalorder %s34, %s35
      %p46 = scmp.eq.s32.totalorder %s26, 0
      %p47 = por %p45, %p46
      %p48 = scmp.ne.s32.totalorder %s34, %s35
      %p49 = scmp.eq.s32.totalorder %s27, 3
      %p50 = por %p48, %p49
      %p52 = scmp.ne.s32.totalorder %s35, %s51
      %p53 = scmp.eq.s32.totalorder %s27, 0
      %p54 = por %p52, %p53
      %s56 = sadd.s32 %s55, 1
      %p59 = scmp.eq.s32.totalorder %s21, 3
      %p60 = scmp.ne.s32.totalorder %s55, %s57
      %p61 = scmp.eq.s32.totalorder %s21, 0
      %p62 = por %p60, %p61
      %p63 = scmp.ne.s32.totalorder %s55, %s57
      %p64 = scmp.eq.s32.totalorder %s26, 3
      %p65 = por %p63, %p64
      %p66 = scmp.ne.s32.totalorder %s57, %s58
      %p67 = scmp.eq.s32.totalorder %s26, 0
      %p68 = por %p66, %p67
      %p69 = scmp.ne.s32.totalorder %s57, %s58
      %p70 = scmp.eq.s32.totalorder %s27, 3
      %p71 = por %p69, %p70
      %p73 = scmp.ne.s32.totalorder %s58, %s72
      %p74 = scmp.eq.s32.totalorder %s27, 0
      %p75 = por %p73, %p74
      %s77 = sadd.s32 %s76, 1
      %p80 = scmp.eq.s32.totalorder %s21, 3
      %p81 = scmp.ne.s32.totalorder %s76, %s78
      %p82 = scmp.eq.s32.totalorder %s21, 0
      %p83 = por %p81, %p82
      %p84 = scmp.ne.s32.totalorder %s76, %s78
      %p85 = scmp.eq.s32.totalorder %s26, 3
      %p86 = por %p84, %p85
      %p87 = scmp.ne.s32.totalorder %s78, %s79
      %p88 = scmp.eq.s32.totalorder %s26, 0
      %p89 = por %p87, %p88
      %p90 = scmp.ne.s32.totalorder %s78, %s79
      %p91 = scmp.eq.s32.totalorder %s27, 3
      %p92 = por %p90, %p91
      %p94 = scmp.ne.s32.totalorder %s79, %s93
      %p95 = scmp.eq.s32.totalorder %s27, 0
      %p96 = por %p94, %p95
      %s98 = sadd.s32 %s97, 1
      %p101 = scmp.eq.s32.totalorder %s21, 3
      %p102 = scmp.ne.s32.totalorder %s97, %s99
      %p103 = scmp.eq.s32.totalorder %s21, 0
      %p104 = por %p102, %p103
      %p105 = scmp.ne.s32.totalorder %s97, %s99
      %p106 = scmp.eq.s32.totalorder %s26, 3
      %p107 = por %p105, %p106
      %p108 = scmp.ne.s32.totalorder %s99, %s100
      %p109 = scmp.eq.s32.totalorder %s26, 0
      %p110 = por %p108, %p109
      %p111 = scmp.ne.s32.totalorder %s99, %s100
      %p112 = scmp.eq.s32.totalorder %s27, 3
      %p113 = por %p111, %p112
      %p115 = scmp.ne.s32.totalorder %s100, %s114
      %p116 = scmp.eq.s32.totalorder %s27, 0
      %p117 = por %p115, %p116
      %s119 = sadd.s32 %s118, 1
      %p122 = scmp.eq.s32.totalorder %s21, 3
      %p123 = scmp.ne.s32.totalorder %s118, %s120
      %p124 = scmp.eq.s32.totalorder %s21, 0
      %p125 = por %p123, %p124
      %p126 = scmp.ne.s32.totalorder %s118, %s120
      %p127 = scmp.eq.s32.totalorder %s26, 3
      %p128 = por %p126, %p127
      %p129 = scmp.ne.s32.totalorder %s120, %s121
      %p130 = scmp.eq.s32.totalorder %s26, 0
      %p131 = por %p129, %p130
      %p132 = scmp.ne.s32.totalorder %s120, %s121
      %p133 = scmp.eq.s32.totalorder %s27, 3
      %p134 = por %p132, %p133
      %p136 = scmp.ne.s32.totalorder %s121, %s135
      %p137 = scmp.eq.s32.totalorder %s27, 0
      %p138 = por %p136, %p137
      %s140 = sadd.s32 %s139, 1
      %p143 = scmp.eq.s32.totalorder %s21, 3
      %p144 = scmp.ne.s32.totalorder %s139, %s141
      %p145 = scmp.eq.s32.totalorder %s21, 0
      %p146 = por %p144, %p145
      %p147 = scmp.ne.s32.totalorder %s139, %s141
      %p148 = scmp.eq.s32.totalorder %s26, 3
      %p149 = por %p147, %p148
      %p150 = scmp.ne.s32.totalorder %s141, %s142
      %p151 = scmp.eq.s32.totalorder %s26, 0
      %p152 = por %p150, %p151
      %p153 = scmp.ne.s32.totalorder %s141, %s142
      %p154 = scmp.eq.s32.totalorder %s27, 3
      %p155 = por %p153, %p154
      %p157 = scmp.ne.s32.totalorder %s142, %s156
      %p158 = scmp.eq.s32.totalorder %s27, 0
      %p159 = por %p157, %p158
      %s161 = sadd.s32 %s160, 1
      %p164 = scmp.eq.s32.totalorder %s21, 3
      %p165 = scmp.ne.s32.totalorder %s160, %s162
      %p166 = scmp.eq.s32.totalorder %s21, 0
      %p167 = por %p165, %p166
      %p168 = scmp.ne.s32.totalorder %s160, %s162
      %p169 = scmp.eq.s32.totalorder %s26, 3
      %p170 = por %p168, %p169
      %p171 = scmp.ne.s32.totalorder %s162, %s163
      %p172 = scmp.eq.s32.totalorder %s26, 0
      %p173 = por %p171, %p172
      %p174 = scmp.ne.s32.totalorder %s162, %s163
      %p175 = scmp.eq.s32.totalorder %s27, 3
      %p176 = por %p174, %p175
      %p178 = scmp.ne.s32.totalorder %s163, %s177
      %p179 = scmp.eq.s32.totalorder %s27, 0
      %p180 = por %p178, %p179
      %s181 = ssub.s32 %s21, %s28
      %p182 = scmp.eq.s32.totalorder %s181, 0
      %s184 = sadd.s32 %s183, 1
      %s185 = scalar_select %p182, %s183, %s184
      %p188 = pneg %p182
      %p189 = scmp.eq.s32.totalorder %s21, 3
      %p190 = por %p188, %p189
      %p191 = scmp.ne.s32.totalorder %s183, %s186
      %p192 = scmp.eq.s32.totalorder %s21, 0
      %p193 = por %p191, %p192
      %p194 = scmp.ne.s32.totalorder %s183, %s186
      %p195 = scmp.eq.s32.totalorder %s26, 3
      %p196 = por %p194, %p195
      %p197 = scmp.ne.s32.totalorder %s186, %s187
      %p198 = scmp.eq.s32.totalorder %s26, 0
      %p199 = por %p197, %p198
      %p200 = scmp.ne.s32.totalorder %s186, %s187
      %p201 = scmp.eq.s32.totalorder %s27, 3
      %p202 = por %p200, %p201
      %p204 = scmp.ne.s32.totalorder %s187, %s203
      %p205 = scmp.eq.s32.totalorder %s27, 0
      %p206 = por %p204, %p205
      %p207 = scmp.le.s32.totalorder 1, %s21
      %p208 = scmp.lt.s32.totalorder %s21, 5
      %p209 = pnand %p207, %p208
      %p210 = pneg %p209
      // Predicated region
      $region9: #{tpu_custom_call.1} parent=5 // pred_check
        _
      $region10: #{tpu_custom_call.1} parent=5 // pred_check_branch
        %212 = sbr.rel (%p209) target = $region12
      $region11: #{tpu_custom_call.1} parent=5 // pred_region
        %s213 = ssub.s32 %s21, 1
        // Predicated region
        $region13: #{tpu_custom_call.1} parent=11 // pred_check
          %p214 = pneg %p68
        $region14: #{tpu_custom_call.1} parent=11 // pred_check_branch
          %216 = sbr.rel (%p214) target = $region16
        $region15: #{tpu_custom_call.1} parent=11 // pred_region
          %s218 = ssub.s32 28672, 28672
          %219 = vsyncadd [#allocation6], %s218
          %s220 = sshll.u32 [#allocation5], 4
          %s221 = int_to_ptr.vmem [resolvable:$true] %s220
          %226 = dma.hbm_to_vmem [thread:$0]  %s1, 28672, %s221, [#allocation6], 256, 256, 16
        $region16: #{tpu_custom_call.1} parent=11 // pred_fallthru
          _
        // Predicated region
        $region17: #{tpu_custom_call.1} parent=11 // pred_check
          %p227 = pneg %p89
        $region18: #{tpu_custom_call.1} parent=11 // pred_check_branch
          %229 = sbr.rel (%p227) target = $region20
        $region19: #{tpu_custom_call.1} parent=11 // pred_region
          _
        $region20: #{tpu_custom_call.1} parent=11 // pred_fallthru
          _
        // Predicated region
        $region21: #{tpu_custom_call.1} parent=11 // pred_check
          %p230 = pneg %p110
        $region22: #{tpu_custom_call.1} parent=11 // pred_check_branch
          %232 = sbr.rel (%p230) target = $region24
        $region23: #{tpu_custom_call.1} parent=11 // pred_region
          %s234 = ssub.s32 16384, 16384
          %235 = vsyncadd [#allocation6], %s234
          %s236 = sshll.u32 [#allocation7], 4
          %s237 = int_to_ptr.vmem [resolvable:$true] %s236
          %242 = dma.hbm_to_vmem [thread:$0]  %s3, 16384, %s237, [#allocation6], 256, 256, 16
        $region24: #{tpu_custom_call.1} parent=11 // pred_fallthru
          _
        // Predicated region
        $region25: #{tpu_custom_call.1} parent=11 // pred_check
          %p243 = pneg %p131
        $region26: #{tpu_custom_call.1} parent=11 // pred_check_branch
          %245 = sbr.rel (%p243) target = $region28
        $region27: #{tpu_custom_call.1} parent=11 // pred_region
          _
        $region28: #{tpu_custom_call.1} parent=11 // pred_fallthru
          _
        // Predicated region
        $region29: #{tpu_custom_call.1} parent=11 // pred_check
          %p246 = pneg %p152
        $region30: #{tpu_custom_call.1} parent=11 // pred_check_branch
          %248 = sbr.rel (%p246) target = $region32
        $region31: #{tpu_custom_call.1} parent=11 // pred_region
          %s250 = ssub.s32 4096, 4096
          %251 = vsyncadd [#allocation9], %s250
          %s252 = sshll.u32 [#allocation8], 4
          %s253 = int_to_ptr.vmem [resolvable:$true] %s252
          %258 = dma.hbm_to_vmem [thread:$0]  %s5, 4096, %s253, [#allocation9], 64, 64, 4
        $region32: #{tpu_custom_call.1} parent=11 // pred_fallthru
          _
        // Predicated region
        $region33: #{tpu_custom_call.1} parent=11 // pred_check
          %p259 = pneg %p173
        $region34: #{tpu_custom_call.1} parent=11 // pred_check_branch
          %261 = sbr.rel (%p259) target = $region36
        $region35: #{tpu_custom_call.1} parent=11 // pred_region
          _
        $region36: #{tpu_custom_call.1} parent=11 // pred_fallthru
          _
      $region12: #{tpu_custom_call.1} parent=5 // pred_fallthru
        _
      %p262 = scmp.lt.s32.totalorder %s21, 4
      // Predicated region
      $region37: #{tpu_custom_call.1} parent=5 // pred_check
        %p263 = pneg %p262
      $region38: #{tpu_custom_call.1} parent=5 // pred_check_branch
        %265 = sbr.rel (%p263) target = $region40
      $region39: #{tpu_custom_call.1} parent=5 // pred_region
        // Predicated region
        $region41: #{tpu_custom_call.1} parent=39 // pred_check
          %p266 = pneg %p41
        $region42: #{tpu_custom_call.1} parent=39 // pred_check_branch
          %268 = sbr.rel (%p266) target = $region44
        $region43: #{tpu_custom_call.1} parent=39 // pred_region
          %s269 = sand.u32 %s31, 1
          %s270 = scalar_lea.sflag [#allocation3], %s269
          %s271 = sand.u32 %s31, 1
          %s272 = smul.addr %s271, 28
          %s273 = scalar_lea.vmem [#allocation2], %s272
          %s275 = ssub.s32 448, 448
          %276 = vsyncadd %s270, %s275
          %s277 = smul.addr %s21, 7
          %s278 = smul.addr %s277, 64
          %s279 = scalar_lea.hbm %s0, %s278
          %s281 = sshll.u32 %s273, 4
          %s282 = int_to_ptr.vmem [resolvable:$true] %s281
          %284 = dma.hbm_to_vmem [thread:$0]  %s279, 448, %s282, %s270
        $region44: #{tpu_custom_call.1} parent=39 // pred_fallthru
          _
      $region40: #{tpu_custom_call.1} parent=5 // pred_fallthru
        _
      %p285 = scmp.le.s32.totalorder 1, %s21
      %p286 = scmp.lt.s32.totalorder %s21, 5
      %p287 = pnand %p285, %p286
      %p288 = pneg %p287
      // Predicated region
      $region45: #{tpu_custom_call.1} parent=5 // pred_check
        _
      $region46: #{tpu_custom_call.1} parent=5 // pred_check_branch
        %290 = sbr.rel (%p287) target = $region48
      $region47: #{tpu_custom_call.1} parent=5 // pred_region
        %s291 = ssub.s32 %s21, 1
        %s292 = sand.u32 %s34, 1
        %s293 = scalar_lea.sflag [#allocation3], %s292
        %s294 = sand.u32 %s34, 1
        %s295 = smul.addr %s294, 28
        %s296 = scalar_lea.vmem [#allocation2], %s295
        // Predicated region
        $region49: #{tpu_custom_call.1} parent=47 // pred_check
          %p297 = pneg %p47
        $region50: #{tpu_custom_call.1} parent=47 // pred_check_branch
          %299 = sbr.rel (%p297) target = $region52
        $region51: #{tpu_custom_call.1} parent=47 // pred_region
          %300 = dma.done %s293, 448
        $region52: #{tpu_custom_call.1} parent=47 // pred_fallthru
          _
        // Predicated region
        $region53: #{tpu_custom_call.1} parent=47 // pred_check
          %p301 = pneg %p68
        $region54: #{tpu_custom_call.1} parent=47 // pred_check_branch
          %303 = sbr.rel (%p301) target = $region56
        $region55: #{tpu_custom_call.1} parent=47 // pred_region
          %304 = dma.done [#allocation6], 28672
        $region56: #{tpu_custom_call.1} parent=47 // pred_fallthru
          _
        // Predicated region
        $region57: #{tpu_custom_call.1} parent=47 // pred_check
          %p305 = pneg %p110
        $region58: #{tpu_custom_call.1} parent=47 // pred_check_branch
          %307 = sbr.rel (%p305) target = $region60
        $region59: #{tpu_custom_call.1} parent=47 // pred_region
          %308 = dma.done [#allocation6], 16384
        $region60: #{tpu_custom_call.1} parent=47 // pred_fallthru
          _
        // Predicated region
        $region61: #{tpu_custom_call.1} parent=47 // pred_check
          %p309 = pneg %p152
        $region62: #{tpu_custom_call.1} parent=47 // pred_check_branch
          %311 = sbr.rel (%p309) target = $region64
        $region63: #{tpu_custom_call.1} parent=47 // pred_region
          %312 = dma.done [#allocation9], 4096
        $region64: #{tpu_custom_call.1} parent=47 // pred_fallthru
          _
        %s313 = sand.u32 %s34, 1
        %s314 = scalar_lea.sflag [#allocation3], %s313
        %s315 = sand.u32 %s34, 1
        %s316 = smul.addr %s315, 28
        %s317 = scalar_lea.vmem [#allocation2], %s316
        %p318 = pneg %p47
        %p319 = pneg %p44
        %p320 = pneg %p68
        %p321 = pneg %p65
        %p322 = pneg %p89
        %p323 = pneg %p86
        %p324 = pneg %p110
        %p325 = pneg %p107
        %p326 = pneg %p131
        %p327 = pneg %p128
        %p328 = pneg %p152
        %p329 = pneg %p149
        %p330 = pneg %p173
        %p331 = pneg %p170
        %p332 = pneg %p199
        %p333 = pneg %p196
        %s334 = sand.u32 %s186, 1
        %s335 = scalar_lea.sflag [#allocation4], %s334
        %s336 = sand.u32 %s186, 1
        %s337 = smul.addr %s336, 8
        %s338 = scalar_lea.vmem [#allocation10], %s337
        %v340 = vld [vmem:[%s296] sm:$0xff]
        %v341 = vld [vmem:[%s296 + $0x8] sm:$0xff]
        %v342 = vld [vmem:[%s296 + $0x10] sm:$0xff]
        %v343 = vld [vmem:[%s296 + $0x18] sm:$0xf]
        %v344 = vld [vmem:[#allocation5] sm:$0xff]
        %v345 = vld [vmem:[#allocation5 + $0x8] sm:$0xff]
        %v346 = vld [vmem:[#allocation5 + $0x10] sm:$0xff]
        %v347 = vld [vmem:[#allocation5 + $0x18] sm:$0xff]
        %v348 = vld [vmem:[#allocation5 + $0x20] sm:$0xff]
        %v349 = vld [vmem:[#allocation5 + $0x28] sm:$0xff]
        %v350 = vld [vmem:[#allocation5 + $0x30] sm:$0xff]
        %v351 = vld [vmem:[#allocation5 + $0x38] sm:$0xff]
        %v352 = vld [vmem:[#allocation5 + $0x40] sm:$0xff]
        %v353 = vld [vmem:[#allocation5 + $0x48] sm:$0xff]
        %v354 = vld [vmem:[#allocation5 + $0x50] sm:$0xff]
        %v355 = vld [vmem:[#allocation5 + $0x58] sm:$0xff]
        %v356 = vld [vmem:[#allocation5 + $0x60] sm:$0xff]
        %v357 = vld [vmem:[#allocation5 + $0x68] sm:$0xff]
        %v358 = vld [vmem:[#allocation5 + $0x70] sm:$0xff]
        %v359 = vld [vmem:[#allocation5 + $0x78] sm:$0xff]
        %v360 = vld [vmem:[#allocation5 + $0x80] sm:$0xff]
        %v361 = vld [vmem:[#allocation5 + $0x88] sm:$0xff]
        %v362 = vld [vmem:[#allocation5 + $0x90] sm:$0xff]
        %v363 = vld [vmem:[#allocation5 + $0x98] sm:$0xff]
        %v364 = vld [vmem:[#allocation5 + $0xa0] sm:$0xff]
        %v365 = vld [vmem:[#allocation5 + $0xa8] sm:$0xff]
        %v366 = vld [vmem:[#allocation5 + $0xb0] sm:$0xff]
        %v367 = vld [vmem:[#allocation5 + $0xb8] sm:$0xff]
        %v368 = vld [vmem:[#allocation5 + $0xc0] sm:$0xff]
        %v369 = vld [vmem:[#allocation5 + $0xc8] sm:$0xff]
        %v370 = vld [vmem:[#allocation5 + $0xd0] sm:$0xff]
        %v371 = vld [vmem:[#allocation5 + $0xd8] sm:$0xff]
        %v372 = vld [vmem:[#allocation5 + $0xe0] sm:$0xff]
        %v373 = vld [vmem:[#allocation5 + $0xe8] sm:$0xff]
        %v374 = vld [vmem:[#allocation5 + $0xf0] sm:$0xff]
        %v375 = vld [vmem:[#allocation5 + $0xf8] sm:$0xff]
        %v376 = vld [vmem:[#allocation5 + $0x100] sm:$0xff]
        %v377 = vld [vmem:[#allocation5 + $0x108] sm:$0xff]
        %v378 = vld [vmem:[#allocation5 + $0x110] sm:$0xff]
        %v379 = vld [vmem:[#allocation5 + $0x118] sm:$0xff]
        %v380 = vld [vmem:[#allocation5 + $0x120] sm:$0xff]
        %v381 = vld [vmem:[#allocation5 + $0x128] sm:$0xff]
        %v382 = vld [vmem:[#allocation5 + $0x130] sm:$0xff]
        %v383 = vld [vmem:[#allocation5 + $0x138] sm:$0xff]
        %v384 = vld [vmem:[#allocation5 + $0x140] sm:$0xff]
        %v385 = vld [vmem:[#allocation5 + $0x148] sm:$0xff]
        %v386 = vld [vmem:[#allocation5 + $0x150] sm:$0xff]
        %v387 = vld [vmem:[#allocation5 + $0x158] sm:$0xff]
        %v388 = vld [vmem:[#allocation5 + $0x160] sm:$0xff]
        %v389 = vld [vmem:[#allocation5 + $0x168] sm:$0xff]
        %v390 = vld [vmem:[#allocation5 + $0x170] sm:$0xff]
        %v391 = vld [vmem:[#allocation5 + $0x178] sm:$0xff]
        %v392 = vld [vmem:[#allocation5 + $0x180] sm:$0xff]
        %v393 = vld [vmem:[#allocation5 + $0x188] sm:$0xff]
        %v394 = vld [vmem:[#allocation5 + $0x190] sm:$0xff]
        %v395 = vld [vmem:[#allocation5 + $0x198] sm:$0xff]
        %v396 = vld [vmem:[#allocation5 + $0x1a0] sm:$0xff]
        %v397 = vld [vmem:[#allocation5 + $0x1a8] sm:$0xff]
        %v398 = vld [vmem:[#allocation5 + $0x1b0] sm:$0xff]
        %v399 = vld [vmem:[#allocation5 + $0x1b8] sm:$0xff]
        %v400 = vld [vmem:[#allocation5 + $0x1c0] sm:$0xff]
        %v401 = vld [vmem:[#allocation5 + $0x1c8] sm:$0xff]
        %v402 = vld [vmem:[#allocation5 + $0x1d0] sm:$0xff]
        %v403 = vld [vmem:[#allocation5 + $0x1d8] sm:$0xff]
        %v404 = vld [vmem:[#allocation5 + $0x1e0] sm:$0xff]
        %v405 = vld [vmem:[#allocation5 + $0x1e8] sm:$0xff]
        %v406 = vld [vmem:[#allocation5 + $0x1f0] sm:$0xff]
        %v407 = vld [vmem:[#allocation5 + $0x1f8] sm:$0xff]
        %v408 = vld [vmem:[#allocation5 + $0x200] sm:$0xff]
        %v409 = vld [vmem:[#allocation5 + $0x208] sm:$0xff]
        %v410 = vld [vmem:[#allocation5 + $0x210] sm:$0xff]
        %v411 = vld [vmem:[#allocation5 + $0x218] sm:$0xff]
        %v412 = vld [vmem:[#allocation5 + $0x220] sm:$0xff]
        %v413 = vld [vmem:[#allocation5 + $0x228] sm:$0xff]
        %v414 = vld [vmem:[#allocation5 + $0x230] sm:$0xff]
        %v415 = vld [vmem:[#allocation5 + $0x238] sm:$0xff]
        %v416 = vld [vmem:[#allocation5 + $0x240] sm:$0xff]
        %v417 = vld [vmem:[#allocation5 + $0x248] sm:$0xff]
        %v418 = vld [vmem:[#allocation5 + $0x250] sm:$0xff]
        %v419 = vld [vmem:[#allocation5 + $0x258] sm:$0xff]
        %v420 = vld [vmem:[#allocation5 + $0x260] sm:$0xff]
        %v421 = vld [vmem:[#allocation5 + $0x268] sm:$0xff]
        %v422 = vld [vmem:[#allocation5 + $0x270] sm:$0xff]
        %v423 = vld [vmem:[#allocation5 + $0x278] sm:$0xff]
        %v424 = vld [vmem:[#allocation5 + $0x280] sm:$0xff]
        %v425 = vld [vmem:[#allocation5 + $0x288] sm:$0xff]
        %v426 = vld [vmem:[#allocation5 + $0x290] sm:$0xff]
        %v427 = vld [vmem:[#allocation5 + $0x298] sm:$0xff]
        %v428 = vld [vmem:[#allocation5 + $0x2a0] sm:$0xff]
        %v429 = vld [vmem:[#allocation5 + $0x2a8] sm:$0xff]
        %v430 = vld [vmem:[#allocation5 + $0x2b0] sm:$0xff]
        %v431 = vld [vmem:[#allocation5 + $0x2b8] sm:$0xff]
        %v432 = vld [vmem:[#allocation5 + $0x2c0] sm:$0xff]
        %v433 = vld [vmem:[#allocation5 + $0x2c8] sm:$0xff]
        %v434 = vld [vmem:[#allocation5 + $0x2d0] sm:$0xff]
        %v435 = vld [vmem:[#allocation5 + $0x2d8] sm:$0xff]
        %v436 = vld [vmem:[#allocation5 + $0x2e0] sm:$0xff]
        %v437 = vld [vmem:[#allocation5 + $0x2e8] sm:$0xff]
        %v438 = vld [vmem:[#allocation5 + $0x2f0] sm:$0xff]
        %v439 = vld [vmem:[#allocation5 + $0x2f8] sm:$0xff]
        %v440 = vld [vmem:[#allocation5 + $0x300] sm:$0xff]
        %v441 = vld [vmem:[#allocation5 + $0x308] sm:$0xff]
        %v442 = vld [vmem:[#allocation5 + $0x310] sm:$0xff]
        %v443 = vld [vmem:[#allocation5 + $0x318] sm:$0xff]
        %v444 = vld [vmem:[#allocation5 + $0x320] sm:$0xff]
        %v445 = vld [vmem:[#allocation5 + $0x328] sm:$0xff]
        %v446 = vld [vmem:[#allocation5 + $0x330] sm:$0xff]
        %v447 = vld [vmem:[#allocation5 + $0x338] sm:$0xff]
        %v448 = vld [vmem:[#allocation5 + $0x340] sm:$0xff]
        %v449 = vld [vmem:[#allocation5 + $0x348] sm:$0xff]
        %v450 = vld [vmem:[#allocation5 + $0x350] sm:$0xff]
        %v451 = vld [vmem:[#allocation5 + $0x358] sm:$0xff]
        %v452 = vld [vmem:[#allocation5 + $0x360] sm:$0xff]
        %v453 = vld [vmem:[#allocation5 + $0x368] sm:$0xff]
        %v454 = vld [vmem:[#allocation5 + $0x370] sm:$0xff]
        %v455 = vld [vmem:[#allocation5 + $0x378] sm:$0xff]
        %v456 = vld [vmem:[#allocation5 + $0x380] sm:$0xff]
        %v457 = vld [vmem:[#allocation5 + $0x388] sm:$0xff]
        %v458 = vld [vmem:[#allocation5 + $0x390] sm:$0xff]
        %v459 = vld [vmem:[#allocation5 + $0x398] sm:$0xff]
        %v460 = vld [vmem:[#allocation5 + $0x3a0] sm:$0xff]
        %v461 = vld [vmem:[#allocation5 + $0x3a8] sm:$0xff]
        %v462 = vld [vmem:[#allocation5 + $0x3b0] sm:$0xff]
        %v463 = vld [vmem:[#allocation5 + $0x3b8] sm:$0xff]
        %v464 = vld [vmem:[#allocation5 + $0x3c0] sm:$0xff]
        %v465 = vld [vmem:[#allocation5 + $0x3c8] sm:$0xff]
        %v466 = vld [vmem:[#allocation5 + $0x3d0] sm:$0xff]
        %v467 = vld [vmem:[#allocation5 + $0x3d8] sm:$0xff]
        %v468 = vld [vmem:[#allocation5 + $0x3e0] sm:$0xff]
        %v469 = vld [vmem:[#allocation5 + $0x3e8] sm:$0xff]
        %v470 = vld [vmem:[#allocation5 + $0x3f0] sm:$0xff]
        %v471 = vld [vmem:[#allocation5 + $0x3f8] sm:$0xff]
        %v472 = vld [vmem:[#allocation5 + $0x400] sm:$0xff]
        %v473 = vld [vmem:[#allocation5 + $0x408] sm:$0xff]
        %v474 = vld [vmem:[#allocation5 + $0x410] sm:$0xff]
        %v475 = vld [vmem:[#allocation5 + $0x418] sm:$0xff]
        %v476 = vld [vmem:[#allocation5 + $0x420] sm:$0xff]
        %v477 = vld [vmem:[#allocation5 + $0x428] sm:$0xff]
        %v478 = vld [vmem:[#allocation5 + $0x430] sm:$0xff]
        %v479 = vld [vmem:[#allocation5 + $0x438] sm:$0xff]
        %v480 = vld [vmem:[#allocation5 + $0x440] sm:$0xff]
        %v481 = vld [vmem:[#allocation5 + $0x448] sm:$0xff]
        %v482 = vld [vmem:[#allocation5 + $0x450] sm:$0xff]
        %v483 = vld [vmem:[#allocation5 + $0x458] sm:$0xff]
        %v484 = vld [vmem:[#allocation5 + $0x460] sm:$0xff]
        %v485 = vld [vmem:[#allocation5 + $0x468] sm:$0xff]
        %v486 = vld [vmem:[#allocation5 + $0x470] sm:$0xff]
        %v487 = vld [vmem:[#allocation5 + $0x478] sm:$0xff]
        %v488 = vld [vmem:[#allocation5 + $0x480] sm:$0xff]
        %v489 = vld [vmem:[#allocation5 + $0x488] sm:$0xff]
        %v490 = vld [vmem:[#allocation5 + $0x490] sm:$0xff]
        %v491 = vld [vmem:[#allocation5 + $0x498] sm:$0xff]
        %v492 = vld [vmem:[#allocation5 + $0x4a0] sm:$0xff]
        %v493 = vld [vmem:[#allocation5 + $0x4a8] sm:$0xff]
        %v494 = vld [vmem:[#allocation5 + $0x4b0] sm:$0xff]
        %v495 = vld [vmem:[#allocation5 + $0x4b8] sm:$0xff]
        %v496 = vld [vmem:[#allocation5 + $0x4c0] sm:$0xff]
        %v497 = vld [vmem:[#allocation5 + $0x4c8] sm:$0xff]
        %v498 = vld [vmem:[#allocation5 + $0x4d0] sm:$0xff]
        %v499 = vld [vmem:[#allocation5 + $0x4d8] sm:$0xff]
        %v500 = vld [vmem:[#allocation5 + $0x4e0] sm:$0xff]
        %v501 = vld [vmem:[#allocation5 + $0x4e8] sm:$0xff]
        %v502 = vld [vmem:[#allocation5 + $0x4f0] sm:$0xff]
        %v503 = vld [vmem:[#allocation5 + $0x4f8] sm:$0xff]
        %v504 = vld [vmem:[#allocation5 + $0x500] sm:$0xff]
        %v505 = vld [vmem:[#allocation5 + $0x508] sm:$0xff]
        %v506 = vld [vmem:[#allocation5 + $0x510] sm:$0xff]
        %v507 = vld [vmem:[#allocation5 + $0x518] sm:$0xff]
        %v508 = vld [vmem:[#allocation5 + $0x520] sm:$0xff]
        %v509 = vld [vmem:[#allocation5 + $0x528] sm:$0xff]
        %v510 = vld [vmem:[#allocation5 + $0x530] sm:$0xff]
        %v511 = vld [vmem:[#allocation5 + $0x538] sm:$0xff]
        %v512 = vld [vmem:[#allocation5 + $0x540] sm:$0xff]
        %v513 = vld [vmem:[#allocation5 + $0x548] sm:$0xff]
        %v514 = vld [vmem:[#allocation5 + $0x550] sm:$0xff]
        %v515 = vld [vmem:[#allocation5 + $0x558] sm:$0xff]
        %v516 = vld [vmem:[#allocation5 + $0x560] sm:$0xff]
        %v517 = vld [vmem:[#allocation5 + $0x568] sm:$0xff]
        %v518 = vld [vmem:[#allocation5 + $0x570] sm:$0xff]
        %v519 = vld [vmem:[#allocation5 + $0x578] sm:$0xff]
        %v520 = vld [vmem:[#allocation5 + $0x580] sm:$0xff]
        %v521 = vld [vmem:[#allocation5 + $0x588] sm:$0xff]
        %v522 = vld [vmem:[#allocation5 + $0x590] sm:$0xff]
        %v523 = vld [vmem:[#allocation5 + $0x598] sm:$0xff]
        %v524 = vld [vmem:[#allocation5 + $0x5a0] sm:$0xff]
        %v525 = vld [vmem:[#allocation5 + $0x5a8] sm:$0xff]
        %v526 = vld [vmem:[#allocation5 + $0x5b0] sm:$0xff]
        %v527 = vld [vmem:[#allocation5 + $0x5b8] sm:$0xff]
        %v528 = vld [vmem:[#allocation5 + $0x5c0] sm:$0xff]
        %v529 = vld [vmem:[#allocation5 + $0x5c8] sm:$0xff]
        %v530 = vld [vmem:[#allocation5 + $0x5d0] sm:$0xff]
        %v531 = vld [vmem:[#allocation5 + $0x5d8] sm:$0xff]
        %v532 = vld [vmem:[#allocation5 + $0x5e0] sm:$0xff]
        %v533 = vld [vmem:[#allocation5 + $0x5e8] sm:$0xff]
        %v534 = vld [vmem:[#allocation5 + $0x5f0] sm:$0xff]
        %v535 = vld [vmem:[#allocation5 + $0x5f8] sm:$0xff]
        %v536 = vld [vmem:[#allocation5 + $0x600] sm:$0xff]
        %v537 = vld [vmem:[#allocation5 + $0x608] sm:$0xff]
        %v538 = vld [vmem:[#allocation5 + $0x610] sm:$0xff]
        %v539 = vld [vmem:[#allocation5 + $0x618] sm:$0xff]
        %v540 = vld [vmem:[#allocation5 + $0x620] sm:$0xff]
        %v541 = vld [vmem:[#allocation5 + $0x628] sm:$0xff]
        %v542 = vld [vmem:[#allocation5 + $0x630] sm:$0xff]
        %v543 = vld [vmem:[#allocation5 + $0x638] sm:$0xff]
        %v544 = vld [vmem:[#allocation5 + $0x640] sm:$0xff]
        %v545 = vld [vmem:[#allocation5 + $0x648] sm:$0xff]
        %v546 = vld [vmem:[#allocation5 + $0x650] sm:$0xff]
        %v547 = vld [vmem:[#allocation5 + $0x658] sm:$0xff]
        %v548 = vld [vmem:[#allocation5 + $0x660] sm:$0xff]
        %v549 = vld [vmem:[#allocation5 + $0x668] sm:$0xff]
        %v550 = vld [vmem:[#allocation5 + $0x670] sm:$0xff]
        %v551 = vld [vmem:[#allocation5 + $0x678] sm:$0xff]
        %v552 = vld [vmem:[#allocation5 + $0x680] sm:$0xff]
        %v553 = vld [vmem:[#allocation5 + $0x688] sm:$0xff]
        %v554 = vld [vmem:[#allocation5 + $0x690] sm:$0xff]
        %v555 = vld [vmem:[#allocation5 + $0x698] sm:$0xff]
        %v556 = vld [vmem:[#allocation5 + $0x6a0] sm:$0xff]
        %v557 = vld [vmem:[#allocation5 + $0x6a8] sm:$0xff]
        %v558 = vld [vmem:[#allocation5 + $0x6b0] sm:$0xff]
        %v559 = vld [vmem:[#allocation5 + $0x6b8] sm:$0xff]
        %v560 = vld [vmem:[#allocation5 + $0x6c0] sm:$0xff]
        %v561 = vld [vmem:[#allocation5 + $0x6c8] sm:$0xff]
        %v562 = vld [vmem:[#allocation5 + $0x6d0] sm:$0xff]
        %v563 = vld [vmem:[#allocation5 + $0x6d8] sm:$0xff]
        %v564 = vld [vmem:[#allocation5 + $0x6e0] sm:$0xff]
        %v565 = vld [vmem:[#allocation5 + $0x6e8] sm:$0xff]
        %v566 = vld [vmem:[#allocation5 + $0x6f0] sm:$0xff]
        %v567 = vld [vmem:[#allocation5 + $0x6f8] sm:$0xff]
        %v568 = vld [vmem:[%s2] sm:$0xf]
        %v570 = vlaneseq
        %v571 = vshrl.u32 %v570, 7
        %v572 = vsub.s32 0, %v571
        %v573 = vrot.slane %v568, %v572
        %v574 = vlaneseq
        %v575 = vshrl.u32 %v574, 7
        %v576 = vsub.s32 1, %v575
        %v577 = vrot.slane %v568, %v576
        %v578 = vlaneseq
        %v579 = vshrl.u32 %v578, 7
        %v580 = vsub.s32 2, %v579
        %v581 = vrot.slane %v568, %v580
        %v582 = vlaneseq
        %v583 = vshrl.u32 %v582, 7
        %v584 = vsub.s32 3, %v583
        %v585 = vrot.slane %v568, %v584
        %v594 = vunpack.c.l.b16 %v340
        %v595 = vunpack.c.h.b16 %v340
        %v596 = vunpack.c.l.b16 %v341
        %v597 = vunpack.c.h.b16 %v341
        %v598 = vunpack.c.l.b16 %v342
        %v599 = vunpack.c.h.b16 %v342
        %v600 = vunpack.c.l.b16 %v343
        %v601 = vpack.c.b16 %v594, %v594
        %v602 = vpack.c.b16 %v595, %v595
        %v603 = vpack.c.b16 %v596, %v596
        %v604 = vpack.c.b16 %v597, %v597
        %v605 = vpack.c.b16 %v598, %v598
        %v606 = vpack.c.b16 %v599, %v599
        %v607 = vpack.c.b16 %v600, %v600
        %v839 = vunpack.c.l.b16 %v344
        %v840 = vunpack.c.h.b16 %v344
        %v841 = vunpack.c.l.b16 %v345
        %v842 = vunpack.c.h.b16 %v345
        %v843 = vunpack.c.l.b16 %v346
        %v844 = vunpack.c.h.b16 %v346
        %v845 = vunpack.c.l.b16 %v347
        %v846 = vunpack.c.h.b16 %v347
        %v847 = vunpack.c.l.b16 %v348
        %v848 = vunpack.c.h.b16 %v348
        %v849 = vunpack.c.l.b16 %v349
        %v850 = vunpack.c.h.b16 %v349
        %v851 = vunpack.c.l.b16 %v350
        %v852 = vunpack.c.h.b16 %v350
        %v853 = vunpack.c.l.b16 %v351
        %v854 = vunpack.c.h.b16 %v351
        %v855 = vunpack.c.l.b16 %v352
        %v856 = vunpack.c.h.b16 %v352
        %v857 = vunpack.c.l.b16 %v353
        %v858 = vunpack.c.h.b16 %v353
        %v859 = vunpack.c.l.b16 %v354
        %v860 = vunpack.c.h.b16 %v354
        %v861 = vunpack.c.l.b16 %v355
        %v862 = vunpack.c.h.b16 %v355
        %v863 = vunpack.c.l.b16 %v356
        %v864 = vunpack.c.h.b16 %v356
        %v865 = vunpack.c.l.b16 %v357
        %v866 = vunpack.c.h.b16 %v357
        %v867 = vunpack.c.l.b16 %v358
        %v868 = vunpack.c.h.b16 %v358
        %v869 = vunpack.c.l.b16 %v359
        %v870 = vunpack.c.h.b16 %v359
        %v871 = vunpack.c.l.b16 %v360
        %v872 = vunpack.c.h.b16 %v360
        %v873 = vunpack.c.l.b16 %v361
        %v874 = vunpack.c.h.b16 %v361
        %v875 = vunpack.c.l.b16 %v362
        %v876 = vunpack.c.h.b16 %v362
        %v877 = vunpack.c.l.b16 %v363
        %v878 = vunpack.c.h.b16 %v363
        %v879 = vunpack.c.l.b16 %v364
        %v880 = vunpack.c.h.b16 %v364
        %v881 = vunpack.c.l.b16 %v365
        %v882 = vunpack.c.h.b16 %v365
        %v883 = vunpack.c.l.b16 %v366
        %v884 = vunpack.c.h.b16 %v366
        %v885 = vunpack.c.l.b16 %v367
        %v886 = vunpack.c.h.b16 %v367
        %v887 = vunpack.c.l.b16 %v368
        %v888 = vunpack.c.h.b16 %v368
        %v889 = vunpack.c.l.b16 %v369
        %v890 = vunpack.c.h.b16 %v369
        %v891 = vunpack.c.l.b16 %v370
        %v892 = vunpack.c.h.b16 %v370
        %v893 = vunpack.c.l.b16 %v371
        %v894 = vunpack.c.h.b16 %v371
        %v895 = vunpack.c.l.b16 %v372
        %v896 = vunpack.c.h.b16 %v372
        %v897 = vunpack.c.l.b16 %v373
        %v898 = vunpack.c.h.b16 %v373
        %v899 = vunpack.c.l.b16 %v374
        %v900 = vunpack.c.h.b16 %v374
        %v901 = vunpack.c.l.b16 %v375
        %v902 = vunpack.c.h.b16 %v375
        %v903 = vunpack.c.l.b16 %v376
        %v904 = vunpack.c.h.b16 %v376
        %v905 = vunpack.c.l.b16 %v377
        %v906 = vunpack.c.h.b16 %v377
        %v907 = vunpack.c.l.b16 %v378
        %v908 = vunpack.c.h.b16 %v378
        %v909 = vunpack.c.l.b16 %v379
        %v910 = vunpack.c.h.b16 %v379
        %v911 = vunpack.c.l.b16 %v380
        %v912 = vunpack.c.h.b16 %v380
        %v913 = vunpack.c.l.b16 %v381
        %v914 = vunpack.c.h.b16 %v381
        %v915 = vunpack.c.l.b16 %v382
        %v916 = vunpack.c.h.b16 %v382
        %v917 = vunpack.c.l.b16 %v383
        %v918 = vunpack.c.h.b16 %v383
        %v919 = vunpack.c.l.b16 %v384
        %v920 = vunpack.c.h.b16 %v384
        %v921 = vunpack.c.l.b16 %v385
        %v922 = vunpack.c.h.b16 %v385
        %v923 = vunpack.c.l.b16 %v386
        %v924 = vunpack.c.h.b16 %v386
        %v925 = vunpack.c.l.b16 %v387
        %v926 = vunpack.c.h.b16 %v387
        %v927 = vunpack.c.l.b16 %v388
        %v928 = vunpack.c.h.b16 %v388
        %v929 = vunpack.c.l.b16 %v389
        %v930 = vunpack.c.h.b16 %v389
        %v931 = vunpack.c.l.b16 %v390
        %v932 = vunpack.c.h.b16 %v390
        %v933 = vunpack.c.l.b16 %v391
        %v934 = vunpack.c.h.b16 %v391
        %v935 = vunpack.c.l.b16 %v392
        %v936 = vunpack.c.h.b16 %v392
        %v937 = vunpack.c.l.b16 %v393
        %v938 = vunpack.c.h.b16 %v393
        %v939 = vunpack.c.l.b16 %v394
        %v940 = vunpack.c.h.b16 %v394
        %v941 = vunpack.c.l.b16 %v395
        %v942 = vunpack.c.h.b16 %v395
        %v943 = vunpack.c.l.b16 %v396
        %v944 = vunpack.c.h.b16 %v396
        %v945 = vunpack.c.l.b16 %v397
        %v946 = vunpack.c.h.b16 %v397
        %v947 = vunpack.c.l.b16 %v398
        %v948 = vunpack.c.h.b16 %v398
        %v949 = vunpack.c.l.b16 %v399
        %v950 = vunpack.c.h.b16 %v399
        %v951 = vunpack.c.l.b16 %v400
        %v952 = vunpack.c.h.b16 %v400
        %v953 = vunpack.c.l.b16 %v401
        %v954 = vunpack.c.h.b16 %v401
        %v955 = vunpack.c.l.b16 %v402
        %v956 = vunpack.c.h.b16 %v402
        %v957 = vunpack.c.l.b16 %v403
        %v958 = vunpack.c.h.b16 %v403
        %v959 = vunpack.c.l.b16 %v404
        %v960 = vunpack.c.h.b16 %v404
        %v961 = vunpack.c.l.b16 %v405
        %v962 = vunpack.c.h.b16 %v405
        %v963 = vunpack.c.l.b16 %v406
        %v964 = vunpack.c.h.b16 %v406
        %v965 = vunpack.c.l.b16 %v407
        %v966 = vunpack.c.h.b16 %v407
        %v967 = vunpack.c.l.b16 %v408
        %v968 = vunpack.c.h.b16 %v408
        %v969 = vunpack.c.l.b16 %v409
        %v970 = vunpack.c.h.b16 %v409
        %v971 = vunpack.c.l.b16 %v410
        %v972 = vunpack.c.h.b16 %v410
        %v973 = vunpack.c.l.b16 %v411
        %v974 = vunpack.c.h.b16 %v411
        %v975 = vunpack.c.l.b16 %v412
        %v976 = vunpack.c.h.b16 %v412
        %v977 = vunpack.c.l.b16 %v413
        %v978 = vunpack.c.h.b16 %v413
        %v979 = vunpack.c.l.b16 %v414
        %v980 = vunpack.c.h.b16 %v414
        %v981 = vunpack.c.l.b16 %v415
        %v982 = vunpack.c.h.b16 %v415
        %v983 = vunpack.c.l.b16 %v416
        %v984 = vunpack.c.h.b16 %v416
        %v985 = vunpack.c.l.b16 %v417
        %v986 = vunpack.c.h.b16 %v417
        %v987 = vunpack.c.l.b16 %v418
        %v988 = vunpack.c.h.b16 %v418
        %v989 = vunpack.c.l.b16 %v419
        %v990 = vunpack.c.h.b16 %v419
        %v991 = vunpack.c.l.b16 %v420
        %v992 = vunpack.c.h.b16 %v420
        %v993 = vunpack.c.l.b16 %v421
        %v994 = vunpack.c.h.b16 %v421
        %v995 = vunpack.c.l.b16 %v422
        %v996 = vunpack.c.h.b16 %v422
        %v997 = vunpack.c.l.b16 %v423
        %v998 = vunpack.c.h.b16 %v423
        %v999 = vunpack.c.l.b16 %v424
        %v1000 = vunpack.c.h.b16 %v424
        %v1001 = vunpack.c.l.b16 %v425
        %v1002 = vunpack.c.h.b16 %v425
        %v1003 = vunpack.c.l.b16 %v426
        %v1004 = vunpack.c.h.b16 %v426
        %v1005 = vunpack.c.l.b16 %v427
        %v1006 = vunpack.c.h.b16 %v427
        %v1007 = vunpack.c.l.b16 %v428
        %v1008 = vunpack.c.h.b16 %v428
        %v1009 = vunpack.c.l.b16 %v429
        %v1010 = vunpack.c.h.b16 %v429
        %v1011 = vunpack.c.l.b16 %v430
        %v1012 = vunpack.c.h.b16 %v430
        %v1013 = vunpack.c.l.b16 %v431
        %v1014 = vunpack.c.h.b16 %v431
        %v1015 = vunpack.c.l.b16 %v432
        %v1016 = vunpack.c.h.b16 %v432
        %v1017 = vunpack.c.l.b16 %v433
        %v1018 = vunpack.c.h.b16 %v433
        %v1019 = vunpack.c.l.b16 %v434
        %v1020 = vunpack.c.h.b16 %v434
        %v1021 = vunpack.c.l.b16 %v435
        %v1022 = vunpack.c.h.b16 %v435
        %v1023 = vunpack.c.l.b16 %v436
        %v1024 = vunpack.c.h.b16 %v436
        %v1025 = vunpack.c.l.b16 %v437
        %v1026 = vunpack.c.h.b16 %v437
        %v1027 = vunpack.c.l.b16 %v438
        %v1028 = vunpack.c.h.b16 %v438
        %v1029 = vunpack.c.l.b16 %v439
        %v1030 = vunpack.c.h.b16 %v439
        %v1031 = vunpack.c.l.b16 %v440
        %v1032 = vunpack.c.h.b16 %v440
        %v1033 = vunpack.c.l.b16 %v441
        %v1034 = vunpack.c.h.b16 %v441
        %v1035 = vunpack.c.l.b16 %v442
        %v1036 = vunpack.c.h.b16 %v442
        %v1037 = vunpack.c.l.b16 %v443
        %v1038 = vunpack.c.h.b16 %v443
        %v1039 = vunpack.c.l.b16 %v444
        %v1040 = vunpack.c.h.b16 %v444
        %v1041 = vunpack.c.l.b16 %v445
        %v1042 = vunpack.c.h.b16 %v445
        %v1043 = vunpack.c.l.b16 %v446
        %v1044 = vunpack.c.h.b16 %v446
        %v1045 = vunpack.c.l.b16 %v447
        %v1046 = vunpack.c.h.b16 %v447
        %v1047 = vunpack.c.l.b16 %v448
        %v1048 = vunpack.c.h.b16 %v448
        %v1049 = vunpack.c.l.b16 %v449
        %v1050 = vunpack.c.h.b16 %v449
        %v1051 = vunpack.c.l.b16 %v450
        %v1052 = vunpack.c.h.b16 %v450
        %v1053 = vunpack.c.l.b16 %v451
        %v1054 = vunpack.c.h.b16 %v451
        %v1055 = vunpack.c.l.b16 %v452
        %v1056 = vunpack.c.h.b16 %v452
        %v1057 = vunpack.c.l.b16 %v453
        %v1058 = vunpack.c.h.b16 %v453
        %v1059 = vunpack.c.l.b16 %v454
        %v1060 = vunpack.c.h.b16 %v454
        %v1061 = vunpack.c.l.b16 %v455
        %v1062 = vunpack.c.h.b16 %v455
        %v1063 = vunpack.c.l.b16 %v456
        %v1064 = vunpack.c.h.b16 %v456
        %v1065 = vunpack.c.l.b16 %v457
        %v1066 = vunpack.c.h.b16 %v457
        %v1067 = vunpack.c.l.b16 %v458
        %v1068 = vunpack.c.h.b16 %v458
        %v1069 = vunpack.c.l.b16 %v459
        %v1070 = vunpack.c.h.b16 %v459
        %v1071 = vunpack.c.l.b16 %v460
        %v1072 = vunpack.c.h.b16 %v460
        %v1073 = vunpack.c.l.b16 %v461
        %v1074 = vunpack.c.h.b16 %v461
        %v1075 = vunpack.c.l.b16 %v462
        %v1076 = vunpack.c.h.b16 %v462
        %v1077 = vunpack.c.l.b16 %v463
        %v1078 = vunpack.c.h.b16 %v463
        %v1079 = vunpack.c.l.b16 %v464
        %v1080 = vunpack.c.h.b16 %v464
        %v1081 = vunpack.c.l.b16 %v465
        %v1082 = vunpack.c.h.b16 %v465
        %v1083 = vunpack.c.l.b16 %v466
        %v1084 = vunpack.c.h.b16 %v466
        %v1085 = vunpack.c.l.b16 %v467
        %v1086 = vunpack.c.h.b16 %v467
        %v1087 = vunpack.c.l.b16 %v468
        %v1088 = vunpack.c.h.b16 %v468
        %v1089 = vunpack.c.l.b16 %v469
        %v1090 = vunpack.c.h.b16 %v469
        %v1091 = vunpack.c.l.b16 %v470
        %v1092 = vunpack.c.h.b16 %v470
        %v1093 = vunpack.c.l.b16 %v471
        %v1094 = vunpack.c.h.b16 %v471
        %v1095 = vunpack.c.l.b16 %v472
        %v1096 = vunpack.c.h.b16 %v472
        %v1097 = vunpack.c.l.b16 %v473
        %v1098 = vunpack.c.h.b16 %v473
        %v1099 = vunpack.c.l.b16 %v474
        %v1100 = vunpack.c.h.b16 %v474
        %v1101 = vunpack.c.l.b16 %v475
        %v1102 = vunpack.c.h.b16 %v475
        %v1103 = vunpack.c.l.b16 %v476
        %v1104 = vunpack.c.h.b16 %v476
        %v1105 = vunpack.c.l.b16 %v477
        %v1106 = vunpack.c.h.b16 %v477
        %v1107 = vunpack.c.l.b16 %v478
        %v1108 = vunpack.c.h.b16 %v478
        %v1109 = vunpack.c.l.b16 %v479
        %v1110 = vunpack.c.h.b16 %v479
        %v1111 = vunpack.c.l.b16 %v480
        %v1112 = vunpack.c.h.b16 %v480
        %v1113 = vunpack.c.l.b16 %v481
        %v1114 = vunpack.c.h.b16 %v481
        %v1115 = vunpack.c.l.b16 %v482
        %v1116 = vunpack.c.h.b16 %v482
        %v1117 = vunpack.c.l.b16 %v483
        %v1118 = vunpack.c.h.b16 %v483
        %v1119 = vunpack.c.l.b16 %v484
        %v1120 = vunpack.c.h.b16 %v484
        %v1121 = vunpack.c.l.b16 %v485
        %v1122 = vunpack.c.h.b16 %v485
        %v1123 = vunpack.c.l.b16 %v486
        %v1124 = vunpack.c.h.b16 %v486
        %v1125 = vunpack.c.l.b16 %v487
        %v1126 = vunpack.c.h.b16 %v487
        %v1127 = vunpack.c.l.b16 %v488
        %v1128 = vunpack.c.h.b16 %v488
        %v1129 = vunpack.c.l.b16 %v489
        %v1130 = vunpack.c.h.b16 %v489
        %v1131 = vunpack.c.l.b16 %v490
        %v1132 = vunpack.c.h.b16 %v490
        %v1133 = vunpack.c.l.b16 %v491
        %v1134 = vunpack.c.h.b16 %v491
        %v1135 = vunpack.c.l.b16 %v492
        %v1136 = vunpack.c.h.b16 %v492
        %v1137 = vunpack.c.l.b16 %v493
        %v1138 = vunpack.c.h.b16 %v493
        %v1139 = vunpack.c.l.b16 %v494
        %v1140 = vunpack.c.h.b16 %v494
        %v1141 = vunpack.c.l.b16 %v495
        %v1142 = vunpack.c.h.b16 %v495
        %v1143 = vunpack.c.l.b16 %v496
        %v1144 = vunpack.c.h.b16 %v496
        %v1145 = vunpack.c.l.b16 %v497
        %v1146 = vunpack.c.h.b16 %v497
        %v1147 = vunpack.c.l.b16 %v498
        %v1148 = vunpack.c.h.b16 %v498
        %v1149 = vunpack.c.l.b16 %v499
        %v1150 = vunpack.c.h.b16 %v499
        %v1151 = vunpack.c.l.b16 %v500
        %v1152 = vunpack.c.h.b16 %v500
        %v1153 = vunpack.c.l.b16 %v501
        %v1154 = vunpack.c.h.b16 %v501
        %v1155 = vunpack.c.l.b16 %v502
        %v1156 = vunpack.c.h.b16 %v502
        %v1157 = vunpack.c.l.b16 %v503
        %v1158 = vunpack.c.h.b16 %v503
        %v1159 = vunpack.c.l.b16 %v504
        %v1160 = vunpack.c.h.b16 %v504
        %v1161 = vunpack.c.l.b16 %v505
        %v1162 = vunpack.c.h.b16 %v505
        %v1163 = vunpack.c.l.b16 %v506
        %v1164 = vunpack.c.h.b16 %v506
        %v1165 = vunpack.c.l.b16 %v507
        %v1166 = vunpack.c.h.b16 %v507
        %v1167 = vunpack.c.l.b16 %v508
        %v1168 = vunpack.c.h.b16 %v508
        %v1169 = vunpack.c.l.b16 %v509
        %v1170 = vunpack.c.h.b16 %v509
        %v1171 = vunpack.c.l.b16 %v510
        %v1172 = vunpack.c.h.b16 %v510
        %v1173 = vunpack.c.l.b16 %v511
        %v1174 = vunpack.c.h.b16 %v511
        %v1175 = vunpack.c.l.b16 %v512
        %v1176 = vunpack.c.h.b16 %v512
        %v1177 = vunpack.c.l.b16 %v513
        %v1178 = vunpack.c.h.b16 %v513
        %v1179 = vunpack.c.l.b16 %v514
        %v1180 = vunpack.c.h.b16 %v514
        %v1181 = vunpack.c.l.b16 %v515
        %v1182 = vunpack.c.h.b16 %v515
        %v1183 = vunpack.c.l.b16 %v516
        %v1184 = vunpack.c.h.b16 %v516
        %v1185 = vunpack.c.l.b16 %v517
        %v1186 = vunpack.c.h.b16 %v517
        %v1187 = vunpack.c.l.b16 %v518
        %v1188 = vunpack.c.h.b16 %v518
        %v1189 = vunpack.c.l.b16 %v519
        %v1190 = vunpack.c.h.b16 %v519
        %v1191 = vunpack.c.l.b16 %v520
        %v1192 = vunpack.c.h.b16 %v520
        %v1193 = vunpack.c.l.b16 %v521
        %v1194 = vunpack.c.h.b16 %v521
        %v1195 = vunpack.c.l.b16 %v522
        %v1196 = vunpack.c.h.b16 %v522
        %v1197 = vunpack.c.l.b16 %v523
        %v1198 = vunpack.c.h.b16 %v523
        %v1199 = vunpack.c.l.b16 %v524
        %v1200 = vunpack.c.h.b16 %v524
        %v1201 = vunpack.c.l.b16 %v525
        %v1202 = vunpack.c.h.b16 %v525
        %v1203 = vunpack.c.l.b16 %v526
        %v1204 = vunpack.c.h.b16 %v526
        %v1205 = vunpack.c.l.b16 %v527
        %v1206 = vunpack.c.h.b16 %v527
        %v1207 = vunpack.c.l.b16 %v528
        %v1208 = vunpack.c.h.b16 %v528
        %v1209 = vunpack.c.l.b16 %v529
        %v1210 = vunpack.c.h.b16 %v529
        %v1211 = vunpack.c.l.b16 %v530
        %v1212 = vunpack.c.h.b16 %v530
        %v1213 = vunpack.c.l.b16 %v531
        %v1214 = vunpack.c.h.b16 %v531
        %v1215 = vunpack.c.l.b16 %v532
        %v1216 = vunpack.c.h.b16 %v532
        %v1217 = vunpack.c.l.b16 %v533
        %v1218 = vunpack.c.h.b16 %v533
        %v1219 = vunpack.c.l.b16 %v534
        %v1220 = vunpack.c.h.b16 %v534
        %v1221 = vunpack.c.l.b16 %v535
        %v1222 = vunpack.c.h.b16 %v535
        %v1223 = vunpack.c.l.b16 %v536
        %v1224 = vunpack.c.h.b16 %v536
        %v1225 = vunpack.c.l.b16 %v537
        %v1226 = vunpack.c.h.b16 %v537
        %v1227 = vunpack.c.l.b16 %v538
        %v1228 = vunpack.c.h.b16 %v538
        %v1229 = vunpack.c.l.b16 %v539
        %v1230 = vunpack.c.h.b16 %v539
        %v1231 = vunpack.c.l.b16 %v540
        %v1232 = vunpack.c.h.b16 %v540
        %v1233 = vunpack.c.l.b16 %v541
        %v1234 = vunpack.c.h.b16 %v541
        %v1235 = vunpack.c.l.b16 %v542
        %v1236 = vunpack.c.h.b16 %v542
        %v1237 = vunpack.c.l.b16 %v543
        %v1238 = vunpack.c.h.b16 %v543
        %v1239 = vunpack.c.l.b16 %v544
        %v1240 = vunpack.c.h.b16 %v544
        %v1241 = vunpack.c.l.b16 %v545
        %v1242 = vunpack.c.h.b16 %v545
        %v1243 = vunpack.c.l.b16 %v546
        %v1244 = vunpack.c.h.b16 %v546
        %v1245 = vunpack.c.l.b16 %v547
        %v1246 = vunpack.c.h.b16 %v547
        %v1247 = vunpack.c.l.b16 %v548
        %v1248 = vunpack.c.h.b16 %v548
        %v1249 = vunpack.c.l.b16 %v549
        %v1250 = vunpack.c.h.b16 %v549
        %v1251 = vunpack.c.l.b16 %v550
        %v1252 = vunpack.c.h.b16 %v550
        %v1253 = vunpack.c.l.b16 %v551
        %v1254 = vunpack.c.h.b16 %v551
        %v1255 = vunpack.c.l.b16 %v552
        %v1256 = vunpack.c.h.b16 %v552
        %v1257 = vunpack.c.l.b16 %v553
        %v1258 = vunpack.c.h.b16 %v553
        %v1259 = vunpack.c.l.b16 %v554
        %v1260 = vunpack.c.h.b16 %v554
        %v1261 = vunpack.c.l.b16 %v555
        %v1262 = vunpack.c.h.b16 %v555
        %v1263 = vunpack.c.l.b16 %v556
        %v1264 = vunpack.c.h.b16 %v556
        %v1265 = vunpack.c.l.b16 %v557
        %v1266 = vunpack.c.h.b16 %v557
        %v1267 = vunpack.c.l.b16 %v558
        %v1268 = vunpack.c.h.b16 %v558
        %v1269 = vunpack.c.l.b16 %v559
        %v1270 = vunpack.c.h.b16 %v559
        %v1271 = vunpack.c.l.b16 %v560
        %v1272 = vunpack.c.h.b16 %v560
        %v1273 = vunpack.c.l.b16 %v561
        %v1274 = vunpack.c.h.b16 %v561
        %v1275 = vunpack.c.l.b16 %v562
        %v1276 = vunpack.c.h.b16 %v562
        %v1277 = vunpack.c.l.b16 %v563
        %v1278 = vunpack.c.h.b16 %v563
        %v1279 = vunpack.c.l.b16 %v564
        %v1280 = vunpack.c.h.b16 %v564
        %v1281 = vunpack.c.l.b16 %v565
        %v1282 = vunpack.c.h.b16 %v565
        %v1283 = vunpack.c.l.b16 %v566
        %v1284 = vunpack.c.h.b16 %v566
        %v1285 = vunpack.c.l.b16 %v567
        %v1286 = vunpack.c.h.b16 %v567
        %v1287 = vpack.c.b16 %v843, %v839
        %v1288 = vpack.c.b16 %v844, %v840
        %v1289 = vpack.c.b16 %v845, %v841
        %v1290 = vpack.c.b16 %v846, %v842
        %v1291 = vpack.c.b16 %v851, %v847
        %v1292 = vpack.c.b16 %v852, %v848
        %v1293 = vpack.c.b16 %v853, %v849
        %v1294 = vpack.c.b16 %v854, %v850
        %v1295 = vpack.c.b16 %v859, %v855
        %v1296 = vpack.c.b16 %v860, %v856
        %v1297 = vpack.c.b16 %v861, %v857
        %v1298 = vpack.c.b16 %v862, %v858
        %v1299 = vpack.c.b16 %v867, %v863
        %v1300 = vpack.c.b16 %v868, %v864
        %v1301 = vpack.c.b16 %v869, %v865
        %v1302 = vpack.c.b16 %v870, %v866
        %v1303 = vpack.c.b16 %v875, %v871
        %v1304 = vpack.c.b16 %v876, %v872
        %v1305 = vpack.c.b16 %v877, %v873
        %v1306 = vpack.c.b16 %v878, %v874
        %v1307 = vpack.c.b16 %v883, %v879
        %v1308 = vpack.c.b16 %v884, %v880
        %v1309 = vpack.c.b16 %v885, %v881
        %v1310 = vpack.c.b16 %v886, %v882
        %v1311 = vpack.c.b16 %v891, %v887
        %v1312 = vpack.c.b16 %v892, %v888
        %v1313 = vpack.c.b16 %v893, %v889
        %v1314 = vpack.c.b16 %v894, %v890
        %v1315 = vpack.c.b16 %v899, %v895
        %v1316 = vpack.c.b16 %v900, %v896
        %v1317 = vpack.c.b16 %v901, %v897
        %v1318 = vpack.c.b16 %v902, %v898
        %v1319 = vpack.c.b16 %v907, %v903
        %v1320 = vpack.c.b16 %v908, %v904
        %v1321 = vpack.c.b16 %v909, %v905
        %v1322 = vpack.c.b16 %v910, %v906
        %v1323 = vpack.c.b16 %v915, %v911
        %v1324 = vpack.c.b16 %v916, %v912
        %v1325 = vpack.c.b16 %v917, %v913
        %v1326 = vpack.c.b16 %v918, %v914
        %v1327 = vpack.c.b16 %v923, %v919
        %v1328 = vpack.c.b16 %v924, %v920
        %v1329 = vpack.c.b16 %v925, %v921
        %v1330 = vpack.c.b16 %v926, %v922
        %v1331 = vpack.c.b16 %v931, %v927
        %v1332 = vpack.c.b16 %v932, %v928
        %v1333 = vpack.c.b16 %v933, %v929
        %v1334 = vpack.c.b16 %v934, %v930
        %v1335 = vpack.c.b16 %v939, %v935
        %v1336 = vpack.c.b16 %v940, %v936
        %v1337 = vpack.c.b16 %v941, %v937
        %v1338 = vpack.c.b16 %v942, %v938
        %v1339 = vpack.c.b16 %v947, %v943
        %v1340 = vpack.c.b16 %v948, %v944
        %v1341 = vpack.c.b16 %v949, %v945
        %v1342 = vpack.c.b16 %v950, %v946
        %v1343 = vpack.c.b16 %v955, %v951
        %v1344 = vpack.c.b16 %v956, %v952
        %v1345 = vpack.c.b16 %v957, %v953
        %v1346 = vpack.c.b16 %v958, %v954
        %v1347 = vpack.c.b16 %v963, %v959
        %v1348 = vpack.c.b16 %v964, %v960
        %v1349 = vpack.c.b16 %v965, %v961
        %v1350 = vpack.c.b16 %v966, %v962
        %v1351 = vpack.c.b16 %v971, %v967
        %v1352 = vpack.c.b16 %v972, %v968
        %v1353 = vpack.c.b16 %v973, %v969
        %v1354 = vpack.c.b16 %v974, %v970
        %v1355 = vpack.c.b16 %v979, %v975
        %v1356 = vpack.c.b16 %v980, %v976
        %v1357 = vpack.c.b16 %v981, %v977
        %v1358 = vpack.c.b16 %v982, %v978
        %v1359 = vpack.c.b16 %v987, %v983
        %v1360 = vpack.c.b16 %v988, %v984
        %v1361 = vpack.c.b16 %v989, %v985
        %v1362 = vpack.c.b16 %v990, %v986
        %v1363 = vpack.c.b16 %v995, %v991
        %v1364 = vpack.c.b16 %v996, %v992
        %v1365 = vpack.c.b16 %v997, %v993
        %v1366 = vpack.c.b16 %v998, %v994
        %v1367 = vpack.c.b16 %v1003, %v999
        %v1368 = vpack.c.b16 %v1004, %v1000
        %v1369 = vpack.c.b16 %v1005, %v1001
        %v1370 = vpack.c.b16 %v1006, %v1002
        %v1371 = vpack.c.b16 %v1011, %v1007
        %v1372 = vpack.c.b16 %v1012, %v1008
        %v1373 = vpack.c.b16 %v1013, %v1009
        %v1374 = vpack.c.b16 %v1014, %v1010
        %v1375 = vpack.c.b16 %v1019, %v1015
        %v1376 = vpack.c.b16 %v1020, %v1016
        %v1377 = vpack.c.b16 %v1021, %v1017
        %v1378 = vpack.c.b16 %v1022, %v1018
        %v1379 = vpack.c.b16 %v1027, %v1023
        %v1380 = vpack.c.b16 %v1028, %v1024
        %v1381 = vpack.c.b16 %v1029, %v1025
        %v1382 = vpack.c.b16 %v1030, %v1026
        %v1383 = vpack.c.b16 %v1035, %v1031
        %v1384 = vpack.c.b16 %v1036, %v1032
        %v1385 = vpack.c.b16 %v1037, %v1033
        %v1386 = vpack.c.b16 %v1038, %v1034
        %v1387 = vpack.c.b16 %v1043, %v1039
        %v1388 = vpack.c.b16 %v1044, %v1040
        %v1389 = vpack.c.b16 %v1045, %v1041
        %v1390 = vpack.c.b16 %v1046, %v1042
        %v1391 = vpack.c.b16 %v1051, %v1047
        %v1392 = vpack.c.b16 %v1052, %v1048
        %v1393 = vpack.c.b16 %v1053, %v1049
        %v1394 = vpack.c.b16 %v1054, %v1050
        %v1395 = vpack.c.b16 %v1059, %v1055
        %v1396 = vpack.c.b16 %v1060, %v1056
        %v1397 = vpack.c.b16 %v1061, %v1057
        %v1398 = vpack.c.b16 %v1062, %v1058
        %v1399 = vpack.c.b16 %v1067, %v1063
        %v1400 = vpack.c.b16 %v1068, %v1064
        %v1401 = vpack.c.b16 %v1069, %v1065
        %v1402 = vpack.c.b16 %v1070, %v1066
        %v1403 = vpack.c.b16 %v1075, %v1071
        %v1404 = vpack.c.b16 %v1076, %v1072
        %v1405 = vpack.c.b16 %v1077, %v1073
        %v1406 = vpack.c.b16 %v1078, %v1074
        %v1407 = vpack.c.b16 %v1083, %v1079
        %v1408 = vpack.c.b16 %v1084, %v1080
        %v1409 = vpack.c.b16 %v1085, %v1081
        %v1410 = vpack.c.b16 %v1086, %v1082
        %v1411 = vpack.c.b16 %v1091, %v1087
        %v1412 = vpack.c.b16 %v1092, %v1088
        %v1413 = vpack.c.b16 %v1093, %v1089
        %v1414 = vpack.c.b16 %v1094, %v1090
        %v1415 = vpack.c.b16 %v1099, %v1095
        %v1416 = vpack.c.b16 %v1100, %v1096
        %v1417 = vpack.c.b16 %v1101, %v1097
        %v1418 = vpack.c.b16 %v1102, %v1098
        %v1419 = vpack.c.b16 %v1107, %v1103
        %v1420 = vpack.c.b16 %v1108, %v1104
        %v1421 = vpack.c.b16 %v1109, %v1105
        %v1422 = vpack.c.b16 %v1110, %v1106
        %v1423 = vpack.c.b16 %v1115, %v1111
        %v1424 = vpack.c.b16 %v1116, %v1112
        %v1425 = vpack.c.b16 %v1117, %v1113
        %v1426 = vpack.c.b16 %v1118, %v1114
        %v1427 = vpack.c.b16 %v1123, %v1119
        %v1428 = vpack.c.b16 %v1124, %v1120
        %v1429 = vpack.c.b16 %v1125, %v1121
        %v1430 = vpack.c.b16 %v1126, %v1122
        %v1431 = vpack.c.b16 %v1131, %v1127
        %v1432 = vpack.c.b16 %v1132, %v1128
        %v1433 = vpack.c.b16 %v1133, %v1129
        %v1434 = vpack.c.b16 %v1134, %v1130
        %v1435 = vpack.c.b16 %v1139, %v1135
        %v1436 = vpack.c.b16 %v1140, %v1136
        %v1437 = vpack.c.b16 %v1141, %v1137
        %v1438 = vpack.c.b16 %v1142, %v1138
        %v1439 = vpack.c.b16 %v1147, %v1143
        %v1440 = vpack.c.b16 %v1148, %v1144
        %v1441 = vpack.c.b16 %v1149, %v1145
        %v1442 = vpack.c.b16 %v1150, %v1146
        %v1443 = vpack.c.b16 %v1155, %v1151
        %v1444 = vpack.c.b16 %v1156, %v1152
        %v1445 = vpack.c.b16 %v1157, %v1153
        %v1446 = vpack.c.b16 %v1158, %v1154
        %v1447 = vpack.c.b16 %v1163, %v1159
        %v1448 = vpack.c.b16 %v1164, %v1160
        %v1449 = vpack.c.b16 %v1165, %v1161
        %v1450 = vpack.c.b16 %v1166, %v1162
        %v1451 = vpack.c.b16 %v1171, %v1167
        %v1452 = vpack.c.b16 %v1172, %v1168
        %v1453 = vpack.c.b16 %v1173, %v1169
        %v1454 = vpack.c.b16 %v1174, %v1170
        %v1455 = vpack.c.b16 %v1179, %v1175
        %v1456 = vpack.c.b16 %v1180, %v1176
        %v1457 = vpack.c.b16 %v1181, %v1177
        %v1458 = vpack.c.b16 %v1182, %v1178
        %v1459 = vpack.c.b16 %v1187, %v1183
        %v1460 = vpack.c.b16 %v1188, %v1184
        %v1461 = vpack.c.b16 %v1189, %v1185
        %v1462 = vpack.c.b16 %v1190, %v1186
        %v1463 = vpack.c.b16 %v1195, %v1191
        %v1464 = vpack.c.b16 %v1196, %v1192
        %v1465 = vpack.c.b16 %v1197, %v1193
        %v1466 = vpack.c.b16 %v1198, %v1194
        %v1467 = vpack.c.b16 %v1203, %v1199
        %v1468 = vpack.c.b16 %v1204, %v1200
        %v1469 = vpack.c.b16 %v1205, %v1201
        %v1470 = vpack.c.b16 %v1206, %v1202
        %v1471 = vpack.c.b16 %v1211, %v1207
        %v1472 = vpack.c.b16 %v1212, %v1208
        %v1473 = vpack.c.b16 %v1213, %v1209
        %v1474 = vpack.c.b16 %v1214, %v1210
        %v1475 = vpack.c.b16 %v1219, %v1215
        %v1476 = vpack.c.b16 %v1220, %v1216
        %v1477 = vpack.c.b16 %v1221, %v1217
        %v1478 = vpack.c.b16 %v1222, %v1218
        %v1479 = vpack.c.b16 %v1227, %v1223
        %v1480 = vpack.c.b16 %v1228, %v1224
        %v1481 = vpack.c.b16 %v1229, %v1225
        %v1482 = vpack.c.b16 %v1230, %v1226
        %v1483 = vpack.c.b16 %v1235, %v1231
        %v1484 = vpack.c.b16 %v1236, %v1232
        %v1485 = vpack.c.b16 %v1237, %v1233
        %v1486 = vpack.c.b16 %v1238, %v1234
        %v1487 = vpack.c.b16 %v1243, %v1239
        %v1488 = vpack.c.b16 %v1244, %v1240
        %v1489 = vpack.c.b16 %v1245, %v1241
        %v1490 = vpack.c.b16 %v1246, %v1242
        %v1491 = vpack.c.b16 %v1251, %v1247
        %v1492 = vpack.c.b16 %v1252, %v1248
        %v1493 = vpack.c.b16 %v1253, %v1249
        %v1494 = vpack.c.b16 %v1254, %v1250
        %v1495 = vpack.c.b16 %v1259, %v1255
        %v1496 = vpack.c.b16 %v1260, %v1256
        %v1497 = vpack.c.b16 %v1261, %v1257
        %v1498 = vpack.c.b16 %v1262, %v1258
        %v1499 = vpack.c.b16 %v1267, %v1263
        %v1500 = vpack.c.b16 %v1268, %v1264
        %v1501 = vpack.c.b16 %v1269, %v1265
        %v1502 = vpack.c.b16 %v1270, %v1266
        %v1503 = vpack.c.b16 %v1275, %v1271
        %v1504 = vpack.c.b16 %v1276, %v1272
        %v1505 = vpack.c.b16 %v1277, %v1273
        %v1506 = vpack.c.b16 %v1278, %v1274
        %v1507 = vpack.c.b16 %v1283, %v1279
        %v1508 = vpack.c.b16 %v1284, %v1280
        %v1509 = vpack.c.b16 %v1285, %v1281
        %v1510 = vpack.c.b16 %v1286, %v1282
        %1735 = vmatprep.subr.bf16.mxu0 %v1288
        %1736 = vmatpush1.bf16.msra.mxu0 %v1287
        %1737 = vmatprep.subr.bf16.mxu0 %v1292
        %1738 = vmatpush1.bf16.msra.mxu0 %v1291
        %1739 = vmatprep.subr.bf16.mxu0 %v1296
        %1740 = vmatpush1.bf16.msra.mxu0 %v1295
        %1741 = vmatprep.subr.bf16.mxu0 %v1300
        %1742 = vmatpush1.bf16.msra.mxu0 %v1299
        %1743 = vmatprep.subr.bf16.mxu0 %v1304
        %1744 = vmatpush1.bf16.msra.mxu0 %v1303
        %1745 = vmatprep.subr.bf16.mxu0 %v1308
        %1746 = vmatpush1.bf16.msra.mxu0 %v1307
        %1747 = vmatprep.subr.bf16.mxu0 %v1312
        %1748 = vmatpush1.bf16.msra.mxu0 %v1311
        %1749 = vmatprep.subr.bf16.mxu0 %v1316
        %1750 = vmatpush1.bf16.msra.mxu0 %v1315
        %1751 = vmatprep.subr.bf16.mxu0 %v1320
        %1752 = vmatpush1.bf16.msra.mxu0 %v1319
        %1753 = vmatprep.subr.bf16.mxu0 %v1324
        %1754 = vmatpush1.bf16.msra.mxu0 %v1323
        %1755 = vmatprep.subr.bf16.mxu0 %v1328
        %1756 = vmatpush1.bf16.msra.mxu0 %v1327
        %1757 = vmatprep.subr.bf16.mxu0 %v1332
        %1758 = vmatpush1.bf16.msra.mxu0 %v1331
        %1759 = vmatprep.subr.bf16.mxu0 %v1336
        %1760 = vmatpush1.bf16.msra.mxu0 %v1335
        %1761 = vmatprep.subr.bf16.mxu0 %v1340
        %1762 = vmatpush1.bf16.msra.mxu0 %v1339
        %1763 = vmatprep.subr.bf16.mxu0 %v1344
        %1764 = vmatpush1.bf16.msra.mxu0 %v1343
        %1765 = vmatprep.subr.bf16.mxu0 %v1348
        %1766 = vmatpush1.bf16.msra.mxu0 %v1347
        %1767 = vmatprep.mubr.bf16.mxu0 %v602
        %1768 = vmatmul.mubr.bf16.gmra.mrb[0].mxu0 %v601
        %v1769 = vpop.f32.mrb[0].mxu0
        %v1770 = vadd.f32 %v573, %v1769
        %v1771 = vpop.f32.mrb[0].mxu0
        %v1772 = vadd.f32 %v577, %v1771
        %v1773 = vpop.f32.mrb[0].mxu0
        %v1774 = vpop.f32.mrb[0].mxu0
        %1775 = vdwg.mxu0
        %1776 = vmatprep.subr.bf16.mxu0 %v1352
        %1777 = vmatpush1.bf16.msra.mxu0 %v1351
        %1778 = vmatprep.subr.bf16.mxu0 %v1356
        %1779 = vmatpush1.bf16.msra.mxu0 %v1355
        %1780 = vmatprep.subr.bf16.mxu0 %v1360
        %1781 = vmatpush1.bf16.msra.mxu0 %v1359
        %1782 = vmatprep.subr.bf16.mxu0 %v1364
        %1783 = vmatpush1.bf16.msra.mxu0 %v1363
        %1784 = vmatprep.subr.bf16.mxu0 %v1368
        %1785 = vmatpush1.bf16.msra.mxu0 %v1367
        %1786 = vmatprep.subr.bf16.mxu0 %v1372
        %1787 = vmatpush1.bf16.msra.mxu0 %v1371
        %1788 = vmatprep.subr.bf16.mxu0 %v1376
        %1789 = vmatpush1.bf16.msra.mxu0 %v1375
        %1790 = vmatprep.subr.bf16.mxu0 %v1380
        %1791 = vmatpush1.bf16.msra.mxu0 %v1379
        %1792 = vmatprep.subr.bf16.mxu0 %v1384
        %1793 = vmatpush1.bf16.msra.mxu0 %v1383
        %1794 = vmatprep.subr.bf16.mxu0 %v1388
        %1795 = vmatpush1.bf16.msra.mxu0 %v1387
        %1796 = vmatprep.subr.bf16.mxu0 %v1392
        %1797 = vmatpush1.bf16.msra.mxu0 %v1391
        %1798 = vmatprep.subr.bf16.mxu0 %v1396
        %1799 = vmatpush1.bf16.msra.mxu0 %v1395
        %1800 = vmatprep.subr.bf16.mxu0 %v1400
        %1801 = vmatpush1.bf16.msra.mxu0 %v1399
        %1802 = vmatprep.subr.bf16.mxu0 %v1404
        %1803 = vmatpush1.bf16.msra.mxu0 %v1403
        %1804 = vmatprep.subr.bf16.mxu0 %v1408
        %1805 = vmatpush1.bf16.msra.mxu0 %v1407
        %1806 = vmatprep.subr.bf16.mxu0 %v1412
        %1807 = vmatpush1.bf16.msra.mxu0 %v1411
        %1808 = vmatprep.mubr.bf16.mxu0 %v604
        %1809 = vmatmul.mubr.bf16.gmra.mrb[0].mxu0 %v603
        %v1810 = vpop.f32.mrb[0].mxu0
        %v1811 = vadd.f32 %v1770, %v1810
        %v1812 = vpop.f32.mrb[0].mxu0
        %v1813 = vadd.f32 %v1772, %v1812
        %v1814 = vpop.f32.mrb[0].mxu0
        %v1815 = vpop.f32.mrb[0].mxu0
        %1816 = vdwg.mxu0
        %1817 = vmatprep.subr.bf16.mxu0 %v1416
        %1818 = vmatpush1.bf16.msra.mxu0 %v1415
        %1819 = vmatprep.subr.bf16.mxu0 %v1420
        %1820 = vmatpush1.bf16.msra.mxu0 %v1419
        %1821 = vmatprep.subr.bf16.mxu0 %v1424
        %1822 = vmatpush1.bf16.msra.mxu0 %v1423
        %1823 = vmatprep.subr.bf16.mxu0 %v1428
        %1824 = vmatpush1.bf16.msra.mxu0 %v1427
        %1825 = vmatprep.subr.bf16.mxu0 %v1432
        %1826 = vmatpush1.bf16.msra.mxu0 %v1431
        %1827 = vmatprep.subr.bf16.mxu0 %v1436
        %1828 = vmatpush1.bf16.msra.mxu0 %v1435
        %1829 = vmatprep.subr.bf16.mxu0 %v1440
        %1830 = vmatpush1.bf16.msra.mxu0 %v1439
        %1831 = vmatprep.subr.bf16.mxu0 %v1444
        %1832 = vmatpush1.bf16.msra.mxu0 %v1443
        %1833 = vmatprep.subr.bf16.mxu0 %v1448
        %1834 = vmatpush1.bf16.msra.mxu0 %v1447
        %1835 = vmatprep.subr.bf16.mxu0 %v1452
        %1836 = vmatpush1.bf16.msra.mxu0 %v1451
        %1837 = vmatprep.subr.bf16.mxu0 %v1456
        %1838 = vmatpush1.bf16.msra.mxu0 %v1455
        %1839 = vmatprep.subr.bf16.mxu0 %v1460
        %1840 = vmatpush1.bf16.msra.mxu0 %v1459
        %1841 = vmatprep.subr.bf16.mxu0 %v1464
        %1842 = vmatpush1.bf16.msra.mxu0 %v1463
        %1843 = vmatprep.subr.bf16.mxu0 %v1468
        %1844 = vmatpush1.bf16.msra.mxu0 %v1467
        %1845 = vmatprep.subr.bf16.mxu0 %v1472
        %1846 = vmatpush1.bf16.msra.mxu0 %v1471
        %1847 = vmatprep.subr.bf16.mxu0 %v1476
        %1848 = vmatpush1.bf16.msra.mxu0 %v1475
        %1849 = vmatprep.mubr.bf16.mxu0 %v606
        %1850 = vmatmul.mubr.bf16.gmra.mrb[0].mxu0 %v605
        %v1851 = vpop.f32.mrb[0].mxu0
        %v1852 = vadd.f32 %v1811, %v1851
        %v1853 = vpop.f32.mrb[0].mxu0
        %v1854 = vadd.f32 %v1813, %v1853
        %v1855 = vpop.f32.mrb[0].mxu0
        %v1856 = vpop.f32.mrb[0].mxu0
        %1857 = vdwg.mxu0
        %1858 = vmatprep.subr.bf16.mxu0 %v1480
        %1859 = vmatpush1.bf16.msra.mxu0 %v1479
        %1860 = vmatprep.subr.bf16.mxu0 %v1484
        %1861 = vmatpush1.bf16.msra.mxu0 %v1483
        %1862 = vmatprep.subr.bf16.mxu0 %v1488
        %1863 = vmatpush1.bf16.msra.mxu0 %v1487
        %1864 = vmatprep.subr.bf16.mxu0 %v1492
        %1865 = vmatpush1.bf16.msra.mxu0 %v1491
        %1866 = vmatprep.subr.bf16.mxu0 %v1496
        %1867 = vmatpush1.bf16.msra.mxu0 %v1495
        %1868 = vmatprep.subr.bf16.mxu0 %v1500
        %1869 = vmatpush1.bf16.msra.mxu0 %v1499
        %1870 = vmatprep.subr.bf16.mxu0 %v1504
        %1871 = vmatpush1.bf16.msra.mxu0 %v1503
        %1872 = vmatprep.subr.bf16.mxu0 %v1508
        %1873 = vmatpush1.bf16.msra.mxu0 %v1507
        %1874 = vmatprep.subr.bf16.mxu0 0
        %1875 = vmatpush1.bf16.msra.mxu0 0
        %1876 = vmatprep.subr.bf16.mxu0 0
        %1877 = vmatpush1.bf16.msra.mxu0 0
        %1878 = vmatprep.subr.bf16.mxu0 0
        %1879 = vmatpush1.bf16.msra.mxu0 0
        %1880 = vmatprep.subr.bf16.mxu0 0
        %1881 = vmatpush1.bf16.msra.mxu0 0
        %1882 = vmatprep.subr.bf16.mxu0 0
        %1883 = vmatpush1.bf16.msra.mxu0 0
        %1884 = vmatprep.subr.bf16.mxu0 0
        %1885 = vmatpush1.bf16.msra.mxu0 0
        %1886 = vmatprep.subr.bf16.mxu0 0
        %1887 = vmatpush1.bf16.msra.mxu0 0
        %1888 = vmatprep.subr.bf16.mxu0 0
        %1889 = vmatpush1.bf16.msra.mxu0 0
        %1890 = vmatprep.mubr.bf16.mxu0 0
        %1891 = vmatmul.mubr.bf16.gmra.mrb[0].mxu0 %v607
        %v1892 = vpop.f32.mrb[0].mxu0
        %v1893 = vadd.f32 %v1852, %v1892
        %v1894 = vpop.f32.mrb[0].mxu0
        %v1895 = vadd.f32 %v1854, %v1894
        %v1896 = vpop.f32.mrb[0].mxu0
        %v1897 = vpop.f32.mrb[0].mxu0
        %1898 = vdwg.mxu0
        %1899 = vmatprep.subr.bf16.mxu0 %v1290
        %1900 = vmatpush1.bf16.msra.mxu0 %v1289
        %1901 = vmatprep.subr.bf16.mxu0 %v1294
        %1902 = vmatpush1.bf16.msra.mxu0 %v1293
        %1903 = vmatprep.subr.bf16.mxu0 %v1298
        %1904 = vmatpush1.bf16.msra.mxu0 %v1297
        %1905 = vmatprep.subr.bf16.mxu0 %v1302
        %1906 = vmatpush1.bf16.msra.mxu0 %v1301
        %1907 = vmatprep.subr.bf16.mxu0 %v1306
        %1908 = vmatpush1.bf16.msra.mxu0 %v1305
        %1909 = vmatprep.subr.bf16.mxu0 %v1310
        %1910 = vmatpush1.bf16.msra.mxu0 %v1309
        %1911 = vmatprep.subr.bf16.mxu0 %v1314
        %1912 = vmatpush1.bf16.msra.mxu0 %v1313
        %1913 = vmatprep.subr.bf16.mxu0 %v1318
        %1914 = vmatpush1.bf16.msra.mxu0 %v1317
        %1915 = vmatprep.subr.bf16.mxu0 %v1322
        %1916 = vmatpush1.bf16.msra.mxu0 %v1321
        %1917 = vmatprep.subr.bf16.mxu0 %v1326
        %1918 = vmatpush1.bf16.msra.mxu0 %v1325
        %1919 = vmatprep.subr.bf16.mxu0 %v1330
        %1920 = vmatpush1.bf16.msra.mxu0 %v1329
        %1921 = vmatprep.subr.bf16.mxu0 %v1334
        %1922 = vmatpush1.bf16.msra.mxu0 %v1333
        %1923 = vmatprep.subr.bf16.mxu0 %v1338
        %1924 = vmatpush1.bf16.msra.mxu0 %v1337
        %1925 = vmatprep.subr.bf16.mxu0 %v1342
        %1926 = vmatpush1.bf16.msra.mxu0 %v1341
        %1927 = vmatprep.subr.bf16.mxu0 %v1346
        %1928 = vmatpush1.bf16.msra.mxu0 %v1345
        %1929 = vmatprep.subr.bf16.mxu0 %v1350
        %1930 = vmatpush1.bf16.msra.mxu0 %v1349
        %1931 = vmatprep.mubr.bf16.mxu0 %v602
        %1932 = vmatmul.mubr.bf16.gmra.mrb[0].mxu0 %v601
        %v1933 = vpop.f32.mrb[0].mxu0
        %v1934 = vadd.f32 %v581, %v1933
        %v1935 = vpop.f32.mrb[0].mxu0
        %v1936 = vadd.f32 %v585, %v1935
        %v1937 = vpop.f32.mrb[0].mxu0
        %v1938 = vpop.f32.mrb[0].mxu0
        %1939 = vdwg.mxu0
        %1940 = vmatprep.subr.bf16.mxu0 %v1354
        %1941 = vmatpush1.bf16.msra.mxu0 %v1353
        %1942 = vmatprep.subr.bf16.mxu0 %v1358
        %1943 = vmatpush1.bf16.msra.mxu0 %v1357
        %1944 = vmatprep.subr.bf16.mxu0 %v1362
        %1945 = vmatpush1.bf16.msra.mxu0 %v1361
        %1946 = vmatprep.subr.bf16.mxu0 %v1366
        %1947 = vmatpush1.bf16.msra.mxu0 %v1365
        %1948 = vmatprep.subr.bf16.mxu0 %v1370
        %1949 = vmatpush1.bf16.msra.mxu0 %v1369
        %1950 = vmatprep.subr.bf16.mxu0 %v1374
        %1951 = vmatpush1.bf16.msra.mxu0 %v1373
        %1952 = vmatprep.subr.bf16.mxu0 %v1378
        %1953 = vmatpush1.bf16.msra.mxu0 %v1377
        %1954 = vmatprep.subr.bf16.mxu0 %v1382
        %1955 = vmatpush1.bf16.msra.mxu0 %v1381
        %1956 = vmatprep.subr.bf16.mxu0 %v1386
        %1957 = vmatpush1.bf16.msra.mxu0 %v1385
        %1958 = vmatprep.subr.bf16.mxu0 %v1390
        %1959 = vmatpush1.bf16.msra.mxu0 %v1389
        %1960 = vmatprep.subr.bf16.mxu0 %v1394
        %1961 = vmatpush1.bf16.msra.mxu0 %v1393
        %1962 = vmatprep.subr.bf16.mxu0 %v1398
        %1963 = vmatpush1.bf16.msra.mxu0 %v1397
        %1964 = vmatprep.subr.bf16.mxu0 %v1402
        %1965 = vmatpush1.bf16.msra.mxu0 %v1401
        %1966 = vmatprep.subr.bf16.mxu0 %v1406
        %1967 = vmatpush1.bf16.msra.mxu0 %v1405
        %1968 = vmatprep.subr.bf16.mxu0 %v1410
        %1969 = vmatpush1.bf16.msra.mxu0 %v1409
        %1970 = vmatprep.subr.bf16.mxu0 %v1414
        %1971 = vmatpush1.bf16.msra.mxu0 %v1413
        %1972 = vmatprep.mubr.bf16.mxu0 %v604
        %1973 = vmatmul.mubr.bf16.gmra.mrb[0].mxu0 %v603
        %v1974 = vpop.f32.mrb[0].mxu0
        %v1975 = vadd.f32 %v1934, %v1974
        %v1976 = vpop.f32.mrb[0].mxu0
        %v1977 = vadd.f32 %v1936, %v1976
        %v1978 = vpop.f32.mrb[0].mxu0
        %v1979 = vpop.f32.mrb[0].mxu0
        %1980 = vdwg.mxu0
        %1981 = vmatprep.subr.bf16.mxu0 %v1418
        %1982 = vmatpush1.bf16.msra.mxu0 %v1417
        %1983 = vmatprep.subr.bf16.mxu0 %v1422
        %1984 = vmatpush1.bf16.msra.mxu0 %v1421
        %1985 = vmatprep.subr.bf16.mxu0 %v1426
        %1986 = vmatpush1.bf16.msra.mxu0 %v1425
        %1987 = vmatprep.subr.bf16.mxu0 %v1430
        %1988 = vmatpush1.bf16.msra.mxu0 %v1429
        %1989 = vmatprep.subr.bf16.mxu0 %v1434
        %1990 = vmatpush1.bf16.msra.mxu0 %v1433
        %1991 = vmatprep.subr.bf16.mxu0 %v1438
        %1992 = vmatpush1.bf16.msra.mxu0 %v1437
        %1993 = vmatprep.subr.bf16.mxu0 %v1442
        %1994 = vmatpush1.bf16.msra.mxu0 %v1441
        %1995 = vmatprep.subr.bf16.mxu0 %v1446
        %1996 = vmatpush1.bf16.msra.mxu0 %v1445
        %1997 = vmatprep.subr.bf16.mxu0 %v1450
        %1998 = vmatpush1.bf16.msra.mxu0 %v1449
        %1999 = vmatprep.subr.bf16.mxu0 %v1454
        %2000 = vmatpush1.bf16.msra.mxu0 %v1453
        %2001 = vmatprep.subr.bf16.mxu0 %v1458
        %2002 = vmatpush1.bf16.msra.mxu0 %v1457
        %2003 = vmatprep.subr.bf16.mxu0 %v1462
        %2004 = vmatpush1.bf16.msra.mxu0 %v1461
        %2005 = vmatprep.subr.bf16.mxu0 %v1466
        %2006 = vmatpush1.bf16.msra.mxu0 %v1465
        %2007 = vmatprep.subr.bf16.mxu0 %v1470
        %2008 = vmatpush1.bf16.msra.mxu0 %v1469
        %2009 = vmatprep.subr.bf16.mxu0 %v1474
        %2010 = vmatpush1.bf16.msra.mxu0 %v1473
        %2011 = vmatprep.subr.bf16.mxu0 %v1478
        %2012 = vmatpush1.bf16.msra.mxu0 %v1477
        %2013 = vmatprep.mubr.bf16.mxu0 %v606
        %2014 = vmatmul.mubr.bf16.gmra.mrb[0].mxu0 %v605
        %v2015 = vpop.f32.mrb[0].mxu0
        %v2016 = vadd.f32 %v1975, %v2015
        %v2017 = vpop.f32.mrb[0].mxu0
        %v2018 = vadd.f32 %v1977, %v2017
        %v2019 = vpop.f32.mrb[0].mxu0
        %v2020 = vpop.f32.mrb[0].mxu0
        %2021 = vdwg.mxu0
        %2022 = vmatprep.subr.bf16.mxu0 %v1482
        %2023 = vmatpush1.bf16.msra.mxu0 %v1481
        %2024 = vmatprep.subr.bf16.mxu0 %v1486
        %2025 = vmatpush1.bf16.msra.mxu0 %v1485
        %2026 = vmatprep.subr.bf16.mxu0 %v1490
        %2027 = vmatpush1.bf16.msra.mxu0 %v1489
        %2028 = vmatprep.subr.bf16.mxu0 %v1494
        %2029 = vmatpush1.bf16.msra.mxu0 %v1493
        %2030 = vmatprep.subr.bf16.mxu0 %v1498
        %2031 = vmatpush1.bf16.msra.mxu0 %v1497
        %2032 = vmatprep.subr.bf16.mxu0 %v1502
        %2033 = vmatpush1.bf16.msra.mxu0 %v1501
        %2034 = vmatprep.subr.bf16.mxu0 %v1506
        %2035 = vmatpush1.bf16.msra.mxu0 %v1505
        %2036 = vmatprep.subr.bf16.mxu0 %v1510
        %2037 = vmatpush1.bf16.msra.mxu0 %v1509
        %2038 = vmatprep.subr.bf16.mxu0 0
        %2039 = vmatpush1.bf16.msra.mxu0 0
        %2040 = vmatprep.subr.bf16.mxu0 0
        %2041 = vmatpush1.bf16.msra.mxu0 0
        %2042 = vmatprep.subr.bf16.mxu0 0
        %2043 = vmatpush1.bf16.msra.mxu0 0
        %2044 = vmatprep.subr.bf16.mxu0 0
        %2045 = vmatpush1.bf16.msra.mxu0 0
        %2046 = vmatprep.subr.bf16.mxu0 0
        %2047 = vmatpush1.bf16.msra.mxu0 0
        %2048 = vmatprep.subr.bf16.mxu0 0
        %2049 = vmatpush1.bf16.msra.mxu0 0
        %2050 = vmatprep.subr.bf16.mxu0 0
        %2051 = vmatpush1.bf16.msra.mxu0 0
        %2052 = vmatprep.subr.bf16.mxu0 0
        %2053 = vmatpush1.bf16.msra.mxu0 0
        %2054 = vmatprep.mubr.bf16.mxu0 0
        %2055 = vmatmul.mubr.bf16.gmra.mrb[0].mxu0 %v607
        %v2056 = vpop.f32.mrb[0].mxu0
        %v2057 = vadd.f32 %v2016, %v2056
        %v2058 = vpop.f32.mrb[0].mxu0
        %v2059 = vadd.f32 %v2018, %v2058
        %v2060 = vpop.f32.mrb[0].mxu0
        %v2061 = vpop.f32.mrb[0].mxu0
        %2062 = vdwg.mxu0
        %v2063 = vmax.f32 %v1893, 0.0
        %v2064 = vmax.f32 %v1895, 0.0
        %v2065 = vmax.f32 %v2057, 0.0
        %v2066 = vmax.f32 %v2059, 0.0
        %v2067 = vpack.c.bf16 %v2063, %v2063
        %v2068 = vpack.c.bf16 %v2064, %v2064
        %v2069 = vpack.c.bf16 %v2065, %v2065
        %v2070 = vpack.c.bf16 %v2066, %v2066
        %v2071 = vld [vmem:[#allocation7] sm:$0xff]
        %v2072 = vld [vmem:[#allocation7 + $0x8] sm:$0xff]
        %v2073 = vld [vmem:[#allocation7 + $0x10] sm:$0xff]
        %v2074 = vld [vmem:[#allocation7 + $0x18] sm:$0xff]
        %v2075 = vld [vmem:[#allocation7 + $0x20] sm:$0xff]
        %v2076 = vld [vmem:[#allocation7 + $0x28] sm:$0xff]
        %v2077 = vld [vmem:[#allocation7 + $0x30] sm:$0xff]
        %v2078 = vld [vmem:[#allocation7 + $0x38] sm:$0xff]
        %v2079 = vld [vmem:[#allocation7 + $0x40] sm:$0xff]
        %v2080 = vld [vmem:[#allocation7 + $0x48] sm:$0xff]
        %v2081 = vld [vmem:[#allocation7 + $0x50] sm:$0xff]
        %v2082 = vld [vmem:[#allocation7 + $0x58] sm:$0xff]
        %v2083 = vld [vmem:[#allocation7 + $0x60] sm:$0xff]
        %v2084 = vld [vmem:[#allocation7 + $0x68] sm:$0xff]
        %v2085 = vld [vmem:[#allocation7 + $0x70] sm:$0xff]
        %v2086 = vld [vmem:[#allocation7 + $0x78] sm:$0xff]
        %v2087 = vld [vmem:[#allocation7 + $0x80] sm:$0xff]
        %v2088 = vld [vmem:[#allocation7 + $0x88] sm:$0xff]
        %v2089 = vld [vmem:[#allocation7 + $0x90] sm:$0xff]
        %v2090 = vld [vmem:[#allocation7 + $0x98] sm:$0xff]
        %v2091 = vld [vmem:[#allocation7 + $0xa0] sm:$0xff]
        %v2092 = vld [vmem:[#allocation7 + $0xa8] sm:$0xff]
        %v2093 = vld [vmem:[#allocation7 + $0xb0] sm:$0xff]
        %v2094 = vld [vmem:[#allocation7 + $0xb8] sm:$0xff]
        %v2095 = vld [vmem:[#allocation7 + $0xc0] sm:$0xff]
        %v2096 = vld [vmem:[#allocation7 + $0xc8] sm:$0xff]
        %v2097 = vld [vmem:[#allocation7 + $0xd0] sm:$0xff]
        %v2098 = vld [vmem:[#allocation7 + $0xd8] sm:$0xff]
        %v2099 = vld [vmem:[#allocation7 + $0xe0] sm:$0xff]
        %v2100 = vld [vmem:[#allocation7 + $0xe8] sm:$0xff]
        %v2101 = vld [vmem:[#allocation7 + $0xf0] sm:$0xff]
        %v2102 = vld [vmem:[#allocation7 + $0xf8] sm:$0xff]
        %v2103 = vld [vmem:[#allocation7 + $0x100] sm:$0xff]
        %v2104 = vld [vmem:[#allocation7 + $0x108] sm:$0xff]
        %v2105 = vld [vmem:[#allocation7 + $0x110] sm:$0xff]
        %v2106 = vld [vmem:[#allocation7 + $0x118] sm:$0xff]
        %v2107 = vld [vmem:[#allocation7 + $0x120] sm:$0xff]
        %v2108 = vld [vmem:[#allocation7 + $0x128] sm:$0xff]
        %v2109 = vld [vmem:[#allocation7 + $0x130] sm:$0xff]
        %v2110 = vld [vmem:[#allocation7 + $0x138] sm:$0xff]
        %v2111 = vld [vmem:[#allocation7 + $0x140] sm:$0xff]
        %v2112 = vld [vmem:[#allocation7 + $0x148] sm:$0xff]
        %v2113 = vld [vmem:[#allocation7 + $0x150] sm:$0xff]
        %v2114 = vld [vmem:[#allocation7 + $0x158] sm:$0xff]
        %v2115 = vld [vmem:[#allocation7 + $0x160] sm:$0xff]
        %v2116 = vld [vmem:[#allocation7 + $0x168] sm:$0xff]
        %v2117 = vld [vmem:[#allocation7 + $0x170] sm:$0xff]
        %v2118 = vld [vmem:[#allocation7 + $0x178] sm:$0xff]
        %v2119 = vld [vmem:[#allocation7 + $0x180] sm:$0xff]
        %v2120 = vld [vmem:[#allocation7 + $0x188] sm:$0xff]
        %v2121 = vld [vmem:[#allocation7 + $0x190] sm:$0xff]
        %v2122 = vld [vmem:[#allocation7 + $0x198] sm:$0xff]
        %v2123 = vld [vmem:[#allocation7 + $0x1a0] sm:$0xff]
        %v2124 = vld [vmem:[#allocation7 + $0x1a8] sm:$0xff]
        %v2125 = vld [vmem:[#allocation7 + $0x1b0] sm:$0xff]
        %v2126 = vld [vmem:[#allocation7 + $0x1b8] sm:$0xff]
        %v2127 = vld [vmem:[#allocation7 + $0x1c0] sm:$0xff]
        %v2128 = vld [vmem:[#allocation7 + $0x1c8] sm:$0xff]
        %v2129 = vld [vmem:[#allocation7 + $0x1d0] sm:$0xff]
        %v2130 = vld [vmem:[#allocation7 + $0x1d8] sm:$0xff]
        %v2131 = vld [vmem:[#allocation7 + $0x1e0] sm:$0xff]
        %v2132 = vld [vmem:[#allocation7 + $0x1e8] sm:$0xff]
        %v2133 = vld [vmem:[#allocation7 + $0x1f0] sm:$0xff]
        %v2134 = vld [vmem:[#allocation7 + $0x1f8] sm:$0xff]
        %v2135 = vld [vmem:[#allocation7 + $0x200] sm:$0xff]
        %v2136 = vld [vmem:[#allocation7 + $0x208] sm:$0xff]
        %v2137 = vld [vmem:[#allocation7 + $0x210] sm:$0xff]
        %v2138 = vld [vmem:[#allocation7 + $0x218] sm:$0xff]
        %v2139 = vld [vmem:[#allocation7 + $0x220] sm:$0xff]
        %v2140 = vld [vmem:[#allocation7 + $0x228] sm:$0xff]
        %v2141 = vld [vmem:[#allocation7 + $0x230] sm:$0xff]
        %v2142 = vld [vmem:[#allocation7 + $0x238] sm:$0xff]
        %v2143 = vld [vmem:[#allocation7 + $0x240] sm:$0xff]
        %v2144 = vld [vmem:[#allocation7 + $0x248] sm:$0xff]
        %v2145 = vld [vmem:[#allocation7 + $0x250] sm:$0xff]
        %v2146 = vld [vmem:[#allocation7 + $0x258] sm:$0xff]
        %v2147 = vld [vmem:[#allocation7 + $0x260] sm:$0xff]
        %v2148 = vld [vmem:[#allocation7 + $0x268] sm:$0xff]
        %v2149 = vld [vmem:[#allocation7 + $0x270] sm:$0xff]
        %v2150 = vld [vmem:[#allocation7 + $0x278] sm:$0xff]
        %v2151 = vld [vmem:[#allocation7 + $0x280] sm:$0xff]
        %v2152 = vld [vmem:[#allocation7 + $0x288] sm:$0xff]
        %v2153 = vld [vmem:[#allocation7 + $0x290] sm:$0xff]
        %v2154 = vld [vmem:[#allocation7 + $0x298] sm:$0xff]
        %v2155 = vld [vmem:[#allocation7 + $0x2a0] sm:$0xff]
        %v2156 = vld [vmem:[#allocation7 + $0x2a8] sm:$0xff]
        %v2157 = vld [vmem:[#allocation7 + $0x2b0] sm:$0xff]
        %v2158 = vld [vmem:[#allocation7 + $0x2b8] sm:$0xff]
        %v2159 = vld [vmem:[#allocation7 + $0x2c0] sm:$0xff]
        %v2160 = vld [vmem:[#allocation7 + $0x2c8] sm:$0xff]
        %v2161 = vld [vmem:[#allocation7 + $0x2d0] sm:$0xff]
        %v2162 = vld [vmem:[#allocation7 + $0x2d8] sm:$0xff]
        %v2163 = vld [vmem:[#allocation7 + $0x2e0] sm:$0xff]
        %v2164 = vld [vmem:[#allocation7 + $0x2e8] sm:$0xff]
        %v2165 = vld [vmem:[#allocation7 + $0x2f0] sm:$0xff]
        %v2166 = vld [vmem:[#allocation7 + $0x2f8] sm:$0xff]
        %v2167 = vld [vmem:[#allocation7 + $0x300] sm:$0xff]
        %v2168 = vld [vmem:[#allocation7 + $0x308] sm:$0xff]
        %v2169 = vld [vmem:[#allocation7 + $0x310] sm:$0xff]
        %v2170 = vld [vmem:[#allocation7 + $0x318] sm:$0xff]
        %v2171 = vld [vmem:[#allocation7 + $0x320] sm:$0xff]
        %v2172 = vld [vmem:[#allocation7 + $0x328] sm:$0xff]
        %v2173 = vld [vmem:[#allocation7 + $0x330] sm:$0xff]
        %v2174 = vld [vmem:[#allocation7 + $0x338] sm:$0xff]
        %v2175 = vld [vmem:[#allocation7 + $0x340] sm:$0xff]
        %v2176 = vld [vmem:[#allocation7 + $0x348] sm:$0xff]
        %v2177 = vld [vmem:[#allocation7 + $0x350] sm:$0xff]
        %v2178 = vld [vmem:[#allocation7 + $0x358] sm:$0xff]
        %v2179 = vld [vmem:[#allocation7 + $0x360] sm:$0xff]
        %v2180 = vld [vmem:[#allocation7 + $0x368] sm:$0xff]
        %v2181 = vld [vmem:[#allocation7 + $0x370] sm:$0xff]
        %v2182 = vld [vmem:[#allocation7 + $0x378] sm:$0xff]
        %v2183 = vld [vmem:[#allocation7 + $0x380] sm:$0xff]
        %v2184 = vld [vmem:[#allocation7 + $0x388] sm:$0xff]
        %v2185 = vld [vmem:[#allocation7 + $0x390] sm:$0xff]
        %v2186 = vld [vmem:[#allocation7 + $0x398] sm:$0xff]
        %v2187 = vld [vmem:[#allocation7 + $0x3a0] sm:$0xff]
        %v2188 = vld [vmem:[#allocation7 + $0x3a8] sm:$0xff]
        %v2189 = vld [vmem:[#allocation7 + $0x3b0] sm:$0xff]
        %v2190 = vld [vmem:[#allocation7 + $0x3b8] sm:$0xff]
        %v2191 = vld [vmem:[#allocation7 + $0x3c0] sm:$0xff]
        %v2192 = vld [vmem:[#allocation7 + $0x3c8] sm:$0xff]
        %v2193 = vld [vmem:[#allocation7 + $0x3d0] sm:$0xff]
        %v2194 = vld [vmem:[#allocation7 + $0x3d8] sm:$0xff]
        %v2195 = vld [vmem:[#allocation7 + $0x3e0] sm:$0xff]
        %v2196 = vld [vmem:[#allocation7 + $0x3e8] sm:$0xff]
        %v2197 = vld [vmem:[#allocation7 + $0x3f0] sm:$0xff]
        %v2198 = vld [vmem:[#allocation7 + $0x3f8] sm:$0xff]
        %v2199 = vld [vmem:[%s4] sm:$0xf]
        %v2201 = vlaneseq
        %v2202 = vshrl.u32 %v2201, 7
        %v2203 = vsub.s32 0, %v2202
        %v2204 = vrot.slane %v2199, %v2203
        %v2205 = vlaneseq
        %v2206 = vshrl.u32 %v2205, 7
        %v2207 = vsub.s32 1, %v2206
        %v2208 = vrot.slane %v2199, %v2207
        %v2209 = vlaneseq
        %v2210 = vshrl.u32 %v2209, 7
        %v2211 = vsub.s32 2, %v2210
        %v2212 = vrot.slane %v2199, %v2211
        %v2213 = vlaneseq
        %v2214 = vshrl.u32 %v2213, 7
        %v2215 = vsub.s32 3, %v2214
        %v2216 = vrot.slane %v2199, %v2215
        %v2349 = vunpack.c.l.b16 %v2071
        %v2350 = vunpack.c.h.b16 %v2071
        %v2351 = vunpack.c.l.b16 %v2072
        %v2352 = vunpack.c.h.b16 %v2072
        %v2353 = vunpack.c.l.b16 %v2073
        %v2354 = vunpack.c.h.b16 %v2073
        %v2355 = vunpack.c.l.b16 %v2074
        %v2356 = vunpack.c.h.b16 %v2074
        %v2357 = vunpack.c.l.b16 %v2075
        %v2358 = vunpack.c.h.b16 %v2075
        %v2359 = vunpack.c.l.b16 %v2076
        %v2360 = vunpack.c.h.b16 %v2076
        %v2361 = vunpack.c.l.b16 %v2077
        %v2362 = vunpack.c.h.b16 %v2077
        %v2363 = vunpack.c.l.b16 %v2078
        %v2364 = vunpack.c.h.b16 %v2078
        %v2365 = vunpack.c.l.b16 %v2079
        %v2366 = vunpack.c.h.b16 %v2079
        %v2367 = vunpack.c.l.b16 %v2080
        %v2368 = vunpack.c.h.b16 %v2080
        %v2369 = vunpack.c.l.b16 %v2081
        %v2370 = vunpack.c.h.b16 %v2081
        %v2371 = vunpack.c.l.b16 %v2082
        %v2372 = vunpack.c.h.b16 %v2082
        %v2373 = vunpack.c.l.b16 %v2083
        %v2374 = vunpack.c.h.b16 %v2083
        %v2375 = vunpack.c.l.b16 %v2084
        %v2376 = vunpack.c.h.b16 %v2084
        %v2377 = vunpack.c.l.b16 %v2085
        %v2378 = vunpack.c.h.b16 %v2085
        %v2379 = vunpack.c.l.b16 %v2086
        %v2380 = vunpack.c.h.b16 %v2086
        %v2381 = vunpack.c.l.b16 %v2087
        %v2382 = vunpack.c.h.b16 %v2087
        %v2383 = vunpack.c.l.b16 %v2088
        %v2384 = vunpack.c.h.b16 %v2088
        %v2385 = vunpack.c.l.b16 %v2089
        %v2386 = vunpack.c.h.b16 %v2089
        %v2387 = vunpack.c.l.b16 %v2090
        %v2388 = vunpack.c.h.b16 %v2090
        %v2389 = vunpack.c.l.b16 %v2091
        %v2390 = vunpack.c.h.b16 %v2091
        %v2391 = vunpack.c.l.b16 %v2092
        %v2392 = vunpack.c.h.b16 %v2092
        %v2393 = vunpack.c.l.b16 %v2093
        %v2394 = vunpack.c.h.b16 %v2093
        %v2395 = vunpack.c.l.b16 %v2094
        %v2396 = vunpack.c.h.b16 %v2094
        %v2397 = vunpack.c.l.b16 %v2095
        %v2398 = vunpack.c.h.b16 %v2095
        %v2399 = vunpack.c.l.b16 %v2096
        %v2400 = vunpack.c.h.b16 %v2096
        %v2401 = vunpack.c.l.b16 %v2097
        %v2402 = vunpack.c.h.b16 %v2097
        %v2403 = vunpack.c.l.b16 %v2098
        %v2404 = vunpack.c.h.b16 %v2098
        %v2405 = vunpack.c.l.b16 %v2099
        %v2406 = vunpack.c.h.b16 %v2099
        %v2407 = vunpack.c.l.b16 %v2100
        %v2408 = vunpack.c.h.b16 %v2100
        %v2409 = vunpack.c.l.b16 %v2101
        %v2410 = vunpack.c.h.b16 %v2101
        %v2411 = vunpack.c.l.b16 %v2102
        %v2412 = vunpack.c.h.b16 %v2102
        %v2413 = vunpack.c.l.b16 %v2103
        %v2414 = vunpack.c.h.b16 %v2103
        %v2415 = vunpack.c.l.b16 %v2104
        %v2416 = vunpack.c.h.b16 %v2104
        %v2417 = vunpack.c.l.b16 %v2105
        %v2418 = vunpack.c.h.b16 %v2105
        %v2419 = vunpack.c.l.b16 %v2106
        %v2420 = vunpack.c.h.b16 %v2106
        %v2421 = vunpack.c.l.b16 %v2107
        %v2422 = vunpack.c.h.b16 %v2107
        %v2423 = vunpack.c.l.b16 %v2108
        %v2424 = vunpack.c.h.b16 %v2108
        %v2425 = vunpack.c.l.b16 %v2109
        %v2426 = vunpack.c.h.b16 %v2109
        %v2427 = vunpack.c.l.b16 %v2110
        %v2428 = vunpack.c.h.b16 %v2110
        %v2429 = vunpack.c.l.b16 %v2111
        %v2430 = vunpack.c.h.b16 %v2111
        %v2431 = vunpack.c.l.b16 %v2112
        %v2432 = vunpack.c.h.b16 %v2112
        %v2433 = vunpack.c.l.b16 %v2113
        %v2434 = vunpack.c.h.b16 %v2113
        %v2435 = vunpack.c.l.b16 %v2114
        %v2436 = vunpack.c.h.b16 %v2114
        %v2437 = vunpack.c.l.b16 %v2115
        %v2438 = vunpack.c.h.b16 %v2115
        %v2439 = vunpack.c.l.b16 %v2116
        %v2440 = vunpack.c.h.b16 %v2116
        %v2441 = vunpack.c.l.b16 %v2117
        %v2442 = vunpack.c.h.b16 %v2117
        %v2443 = vunpack.c.l.b16 %v2118
        %v2444 = vunpack.c.h.b16 %v2118
        %v2445 = vunpack.c.l.b16 %v2119
        %v2446 = vunpack.c.h.b16 %v2119
        %v2447 = vunpack.c.l.b16 %v2120
        %v2448 = vunpack.c.h.b16 %v2120
        %v2449 = vunpack.c.l.b16 %v2121
        %v2450 = vunpack.c.h.b16 %v2121
        %v2451 = vunpack.c.l.b16 %v2122
        %v2452 = vunpack.c.h.b16 %v2122
        %v2453 = vunpack.c.l.b16 %v2123
        %v2454 = vunpack.c.h.b16 %v2123
        %v2455 = vunpack.c.l.b16 %v2124
        %v2456 = vunpack.c.h.b16 %v2124
        %v2457 = vunpack.c.l.b16 %v2125
        %v2458 = vunpack.c.h.b16 %v2125
        %v2459 = vunpack.c.l.b16 %v2126
        %v2460 = vunpack.c.h.b16 %v2126
        %v2461 = vunpack.c.l.b16 %v2127
        %v2462 = vunpack.c.h.b16 %v2127
        %v2463 = vunpack.c.l.b16 %v2128
        %v2464 = vunpack.c.h.b16 %v2128
        %v2465 = vunpack.c.l.b16 %v2129
        %v2466 = vunpack.c.h.b16 %v2129
        %v2467 = vunpack.c.l.b16 %v2130
        %v2468 = vunpack.c.h.b16 %v2130
        %v2469 = vunpack.c.l.b16 %v2131
        %v2470 = vunpack.c.h.b16 %v2131
        %v2471 = vunpack.c.l.b16 %v2132
        %v2472 = vunpack.c.h.b16 %v2132
        %v2473 = vunpack.c.l.b16 %v2133
        %v2474 = vunpack.c.h.b16 %v2133
        %v2475 = vunpack.c.l.b16 %v2134
        %v2476 = vunpack.c.h.b16 %v2134
        %v2477 = vunpack.c.l.b16 %v2135
        %v2478 = vunpack.c.h.b16 %v2135
        %v2479 = vunpack.c.l.b16 %v2136
        %v2480 = vunpack.c.h.b16 %v2136
        %v2481 = vunpack.c.l.b16 %v2137
        %v2482 = vunpack.c.h.b16 %v2137
        %v2483 = vunpack.c.l.b16 %v2138
        %v2484 = vunpack.c.h.b16 %v2138
        %v2485 = vunpack.c.l.b16 %v2139
        %v2486 = vunpack.c.h.b16 %v2139
        %v2487 = vunpack.c.l.b16 %v2140
        %v2488 = vunpack.c.h.b16 %v2140
        %v2489 = vunpack.c.l.b16 %v2141
        %v2490 = vunpack.c.h.b16 %v2141
        %v2491 = vunpack.c.l.b16 %v2142
        %v2492 = vunpack.c.h.b16 %v2142
        %v2493 = vunpack.c.l.b16 %v2143
        %v2494 = vunpack.c.h.b16 %v2143
        %v2495 = vunpack.c.l.b16 %v2144
        %v2496 = vunpack.c.h.b16 %v2144
        %v2497 = vunpack.c.l.b16 %v2145
        %v2498 = vunpack.c.h.b16 %v2145
        %v2499 = vunpack.c.l.b16 %v2146
        %v2500 = vunpack.c.h.b16 %v2146
        %v2501 = vunpack.c.l.b16 %v2147
        %v2502 = vunpack.c.h.b16 %v2147
        %v2503 = vunpack.c.l.b16 %v2148
        %v2504 = vunpack.c.h.b16 %v2148
        %v2505 = vunpack.c.l.b16 %v2149
        %v2506 = vunpack.c.h.b16 %v2149
        %v2507 = vunpack.c.l.b16 %v2150
        %v2508 = vunpack.c.h.b16 %v2150
        %v2509 = vunpack.c.l.b16 %v2151
        %v2510 = vunpack.c.h.b16 %v2151
        %v2511 = vunpack.c.l.b16 %v2152
        %v2512 = vunpack.c.h.b16 %v2152
        %v2513 = vunpack.c.l.b16 %v2153
        %v2514 = vunpack.c.h.b16 %v2153
        %v2515 = vunpack.c.l.b16 %v2154
        %v2516 = vunpack.c.h.b16 %v2154
        %v2517 = vunpack.c.l.b16 %v2155
        %v2518 = vunpack.c.h.b16 %v2155
        %v2519 = vunpack.c.l.b16 %v2156
        %v2520 = vunpack.c.h.b16 %v2156
        %v2521 = vunpack.c.l.b16 %v2157
        %v2522 = vunpack.c.h.b16 %v2157
        %v2523 = vunpack.c.l.b16 %v2158
        %v2524 = vunpack.c.h.b16 %v2158
        %v2525 = vunpack.c.l.b16 %v2159
        %v2526 = vunpack.c.h.b16 %v2159
        %v2527 = vunpack.c.l.b16 %v2160
        %v2528 = vunpack.c.h.b16 %v2160
        %v2529 = vunpack.c.l.b16 %v2161
        %v2530 = vunpack.c.h.b16 %v2161
        %v2531 = vunpack.c.l.b16 %v2162
        %v2532 = vunpack.c.h.b16 %v2162
        %v2533 = vunpack.c.l.b16 %v2163
        %v2534 = vunpack.c.h.b16 %v2163
        %v2535 = vunpack.c.l.b16 %v2164
        %v2536 = vunpack.c.h.b16 %v2164
        %v2537 = vunpack.c.l.b16 %v2165
        %v2538 = vunpack.c.h.b16 %v2165
        %v2539 = vunpack.c.l.b16 %v2166
        %v2540 = vunpack.c.h.b16 %v2166
        %v2541 = vunpack.c.l.b16 %v2167
        %v2542 = vunpack.c.h.b16 %v2167
        %v2543 = vunpack.c.l.b16 %v2168
        %v2544 = vunpack.c.h.b16 %v2168
        %v2545 = vunpack.c.l.b16 %v2169
        %v2546 = vunpack.c.h.b16 %v2169
        %v2547 = vunpack.c.l.b16 %v2170
        %v2548 = vunpack.c.h.b16 %v2170
        %v2549 = vunpack.c.l.b16 %v2171
        %v2550 = vunpack.c.h.b16 %v2171
        %v2551 = vunpack.c.l.b16 %v2172
        %v2552 = vunpack.c.h.b16 %v2172
        %v2553 = vunpack.c.l.b16 %v2173
        %v2554 = vunpack.c.h.b16 %v2173
        %v2555 = vunpack.c.l.b16 %v2174
        %v2556 = vunpack.c.h.b16 %v2174
        %v2557 = vunpack.c.l.b16 %v2175
        %v2558 = vunpack.c.h.b16 %v2175
        %v2559 = vunpack.c.l.b16 %v2176
        %v2560 = vunpack.c.h.b16 %v2176
        %v2561 = vunpack.c.l.b16 %v2177
        %v2562 = vunpack.c.h.b16 %v2177
        %v2563 = vunpack.c.l.b16 %v2178
        %v2564 = vunpack.c.h.b16 %v2178
        %v2565 = vunpack.c.l.b16 %v2179
        %v2566 = vunpack.c.h.b16 %v2179
        %v2567 = vunpack.c.l.b16 %v2180
        %v2568 = vunpack.c.h.b16 %v2180
        %v2569 = vunpack.c.l.b16 %v2181
        %v2570 = vunpack.c.h.b16 %v2181
        %v2571 = vunpack.c.l.b16 %v2182
        %v2572 = vunpack.c.h.b16 %v2182
        %v2573 = vunpack.c.l.b16 %v2183
        %v2574 = vunpack.c.h.b16 %v2183
        %v2575 = vunpack.c.l.b16 %v2184
        %v2576 = vunpack.c.h.b16 %v2184
        %v2577 = vunpack.c.l.b16 %v2185
        %v2578 = vunpack.c.h.b16 %v2185
        %v2579 = vunpack.c.l.b16 %v2186
        %v2580 = vunpack.c.h.b16 %v2186
        %v2581 = vunpack.c.l.b16 %v2187
        %v2582 = vunpack.c.h.b16 %v2187
        %v2583 = vunpack.c.l.b16 %v2188
        %v2584 = vunpack.c.h.b16 %v2188
        %v2585 = vunpack.c.l.b16 %v2189
        %v2586 = vunpack.c.h.b16 %v2189
        %v2587 = vunpack.c.l.b16 %v2190
        %v2588 = vunpack.c.h.b16 %v2190
        %v2589 = vunpack.c.l.b16 %v2191
        %v2590 = vunpack.c.h.b16 %v2191
        %v2591 = vunpack.c.l.b16 %v2192
        %v2592 = vunpack.c.h.b16 %v2192
        %v2593 = vunpack.c.l.b16 %v2193
        %v2594 = vunpack.c.h.b16 %v2193
        %v2595 = vunpack.c.l.b16 %v2194
        %v2596 = vunpack.c.h.b16 %v2194
        %v2597 = vunpack.c.l.b16 %v2195
        %v2598 = vunpack.c.h.b16 %v2195
        %v2599 = vunpack.c.l.b16 %v2196
        %v2600 = vunpack.c.h.b16 %v2196
        %v2601 = vunpack.c.l.b16 %v2197
        %v2602 = vunpack.c.h.b16 %v2197
        %v2603 = vunpack.c.l.b16 %v2198
        %v2604 = vunpack.c.h.b16 %v2198
        %v2605 = vpack.c.b16 %v2353, %v2349
        %v2606 = vpack.c.b16 %v2354, %v2350
        %v2607 = vpack.c.b16 %v2355, %v2351
        %v2608 = vpack.c.b16 %v2356, %v2352
        %v2609 = vpack.c.b16 %v2361, %v2357
        %v2610 = vpack.c.b16 %v2362, %v2358
        %v2611 = vpack.c.b16 %v2363, %v2359
        %v2612 = vpack.c.b16 %v2364, %v2360
        %v2613 = vpack.c.b16 %v2369, %v2365
        %v2614 = vpack.c.b16 %v2370, %v2366
        %v2615 = vpack.c.b16 %v2371, %v2367
        %v2616 = vpack.c.b16 %v2372, %v2368
        %v2617 = vpack.c.b16 %v2377, %v2373
        %v2618 = vpack.c.b16 %v2378, %v2374
        %v2619 = vpack.c.b16 %v2379, %v2375
        %v2620 = vpack.c.b16 %v2380, %v2376
        %v2621 = vpack.c.b16 %v2385, %v2381
        %v2622 = vpack.c.b16 %v2386, %v2382
        %v2623 = vpack.c.b16 %v2387, %v2383
        %v2624 = vpack.c.b16 %v2388, %v2384
        %v2625 = vpack.c.b16 %v2393, %v2389
        %v2626 = vpack.c.b16 %v2394, %v2390
        %v2627 = vpack.c.b16 %v2395, %v2391
        %v2628 = vpack.c.b16 %v2396, %v2392
        %v2629 = vpack.c.b16 %v2401, %v2397
        %v2630 = vpack.c.b16 %v2402, %v2398
        %v2631 = vpack.c.b16 %v2403, %v2399
        %v2632 = vpack.c.b16 %v2404, %v2400
        %v2633 = vpack.c.b16 %v2409, %v2405
        %v2634 = vpack.c.b16 %v2410, %v2406
        %v2635 = vpack.c.b16 %v2411, %v2407
        %v2636 = vpack.c.b16 %v2412, %v2408
        %v2637 = vpack.c.b16 %v2417, %v2413
        %v2638 = vpack.c.b16 %v2418, %v2414
        %v2639 = vpack.c.b16 %v2419, %v2415
        %v2640 = vpack.c.b16 %v2420, %v2416
        %v2641 = vpack.c.b16 %v2425, %v2421
        %v2642 = vpack.c.b16 %v2426, %v2422
        %v2643 = vpack.c.b16 %v2427, %v2423
        %v2644 = vpack.c.b16 %v2428, %v2424
        %v2645 = vpack.c.b16 %v2433, %v2429
        %v2646 = vpack.c.b16 %v2434, %v2430
        %v2647 = vpack.c.b16 %v2435, %v2431
        %v2648 = vpack.c.b16 %v2436, %v2432
        %v2649 = vpack.c.b16 %v2441, %v2437
        %v2650 = vpack.c.b16 %v2442, %v2438
        %v2651 = vpack.c.b16 %v2443, %v2439
        %v2652 = vpack.c.b16 %v2444, %v2440
        %v2653 = vpack.c.b16 %v2449, %v2445
        %v2654 = vpack.c.b16 %v2450, %v2446
        %v2655 = vpack.c.b16 %v2451, %v2447
        %v2656 = vpack.c.b16 %v2452, %v2448
        %v2657 = vpack.c.b16 %v2457, %v2453
        %v2658 = vpack.c.b16 %v2458, %v2454
        %v2659 = vpack.c.b16 %v2459, %v2455
        %v2660 = vpack.c.b16 %v2460, %v2456
        %v2661 = vpack.c.b16 %v2465, %v2461
        %v2662 = vpack.c.b16 %v2466, %v2462
        %v2663 = vpack.c.b16 %v2467, %v2463
        %v2664 = vpack.c.b16 %v2468, %v2464
        %v2665 = vpack.c.b16 %v2473, %v2469
        %v2666 = vpack.c.b16 %v2474, %v2470
        %v2667 = vpack.c.b16 %v2475, %v2471
        %v2668 = vpack.c.b16 %v2476, %v2472
        %v2669 = vpack.c.b16 %v2481, %v2477
        %v2670 = vpack.c.b16 %v2482, %v2478
        %v2671 = vpack.c.b16 %v2483, %v2479
        %v2672 = vpack.c.b16 %v2484, %v2480
        %v2673 = vpack.c.b16 %v2489, %v2485
        %v2674 = vpack.c.b16 %v2490, %v2486
        %v2675 = vpack.c.b16 %v2491, %v2487
        %v2676 = vpack.c.b16 %v2492, %v2488
        %v2677 = vpack.c.b16 %v2497, %v2493
        %v2678 = vpack.c.b16 %v2498, %v2494
        %v2679 = vpack.c.b16 %v2499, %v2495
        %v2680 = vpack.c.b16 %v2500, %v2496
        %v2681 = vpack.c.b16 %v2505, %v2501
        %v2682 = vpack.c.b16 %v2506, %v2502
        %v2683 = vpack.c.b16 %v2507, %v2503
        %v2684 = vpack.c.b16 %v2508, %v2504
        %v2685 = vpack.c.b16 %v2513, %v2509
        %v2686 = vpack.c.b16 %v2514, %v2510
        %v2687 = vpack.c.b16 %v2515, %v2511
        %v2688 = vpack.c.b16 %v2516, %v2512
        %v2689 = vpack.c.b16 %v2521, %v2517
        %v2690 = vpack.c.b16 %v2522, %v2518
        %v2691 = vpack.c.b16 %v2523, %v2519
        %v2692 = vpack.c.b16 %v2524, %v2520
        %v2693 = vpack.c.b16 %v2529, %v2525
        %v2694 = vpack.c.b16 %v2530, %v2526
        %v2695 = vpack.c.b16 %v2531, %v2527
        %v2696 = vpack.c.b16 %v2532, %v2528
        %v2697 = vpack.c.b16 %v2537, %v2533
        %v2698 = vpack.c.b16 %v2538, %v2534
        %v2699 = vpack.c.b16 %v2539, %v2535
        %v2700 = vpack.c.b16 %v2540, %v2536
        %v2701 = vpack.c.b16 %v2545, %v2541
        %v2702 = vpack.c.b16 %v2546, %v2542
        %v2703 = vpack.c.b16 %v2547, %v2543
        %v2704 = vpack.c.b16 %v2548, %v2544
        %v2705 = vpack.c.b16 %v2553, %v2549
        %v2706 = vpack.c.b16 %v2554, %v2550
        %v2707 = vpack.c.b16 %v2555, %v2551
        %v2708 = vpack.c.b16 %v2556, %v2552
        %v2709 = vpack.c.b16 %v2561, %v2557
        %v2710 = vpack.c.b16 %v2562, %v2558
        %v2711 = vpack.c.b16 %v2563, %v2559
        %v2712 = vpack.c.b16 %v2564, %v2560
        %v2713 = vpack.c.b16 %v2569, %v2565
        %v2714 = vpack.c.b16 %v2570, %v2566
        %v2715 = vpack.c.b16 %v2571, %v2567
        %v2716 = vpack.c.b16 %v2572, %v2568
        %v2717 = vpack.c.b16 %v2577, %v2573
        %v2718 = vpack.c.b16 %v2578, %v2574
        %v2719 = vpack.c.b16 %v2579, %v2575
        %v2720 = vpack.c.b16 %v2580, %v2576
        %v2721 = vpack.c.b16 %v2585, %v2581
        %v2722 = vpack.c.b16 %v2586, %v2582
        %v2723 = vpack.c.b16 %v2587, %v2583
        %v2724 = vpack.c.b16 %v2588, %v2584
        %v2725 = vpack.c.b16 %v2593, %v2589
        %v2726 = vpack.c.b16 %v2594, %v2590
        %v2727 = vpack.c.b16 %v2595, %v2591
        %v2728 = vpack.c.b16 %v2596, %v2592
        %v2729 = vpack.c.b16 %v2601, %v2597
        %v2730 = vpack.c.b16 %v2602, %v2598
        %v2731 = vpack.c.b16 %v2603, %v2599
        %v2732 = vpack.c.b16 %v2604, %v2600
        %2861 = vmatprep.subr.bf16.mxu0 %v2606
        %2862 = vmatpush1.bf16.msra.mxu0 %v2605
        %2863 = vmatprep.subr.bf16.mxu0 %v2610
        %2864 = vmatpush1.bf16.msra.mxu0 %v2609
        %2865 = vmatprep.subr.bf16.mxu0 %v2614
        %2866 = vmatpush1.bf16.msra.mxu0 %v2613
        %2867 = vmatprep.subr.bf16.mxu0 %v2618
        %2868 = vmatpush1.bf16.msra.mxu0 %v2617
        %2869 = vmatprep.subr.bf16.mxu0 %v2622
        %2870 = vmatpush1.bf16.msra.mxu0 %v2621
        %2871 = vmatprep.subr.bf16.mxu0 %v2626
        %2872 = vmatpush1.bf16.msra.mxu0 %v2625
        %2873 = vmatprep.subr.bf16.mxu0 %v2630
        %2874 = vmatpush1.bf16.msra.mxu0 %v2629
        %2875 = vmatprep.subr.bf16.mxu0 %v2634
        %2876 = vmatpush1.bf16.msra.mxu0 %v2633
        %2877 = vmatprep.subr.bf16.mxu0 %v2638
        %2878 = vmatpush1.bf16.msra.mxu0 %v2637
        %2879 = vmatprep.subr.bf16.mxu0 %v2642
        %2880 = vmatpush1.bf16.msra.mxu0 %v2641
        %2881 = vmatprep.subr.bf16.mxu0 %v2646
        %2882 = vmatpush1.bf16.msra.mxu0 %v2645
        %2883 = vmatprep.subr.bf16.mxu0 %v2650
        %2884 = vmatpush1.bf16.msra.mxu0 %v2649
        %2885 = vmatprep.subr.bf16.mxu0 %v2654
        %2886 = vmatpush1.bf16.msra.mxu0 %v2653
        %2887 = vmatprep.subr.bf16.mxu0 %v2658
        %2888 = vmatpush1.bf16.msra.mxu0 %v2657
        %2889 = vmatprep.subr.bf16.mxu0 %v2662
        %2890 = vmatpush1.bf16.msra.mxu0 %v2661
        %2891 = vmatprep.subr.bf16.mxu0 %v2666
        %2892 = vmatpush1.bf16.msra.mxu0 %v2665
        %2893 = vmatprep.mubr.bf16.mxu0 %v2068
        %2894 = vmatmul.mubr.bf16.gmra.mrb[0].mxu0 %v2067
        %v2895 = vpop.f32.mrb[0].mxu0
        %v2896 = vadd.f32 %v2204, %v2895
        %v2897 = vpop.f32.mrb[0].mxu0
        %v2898 = vadd.f32 %v2208, %v2897
        %v2899 = vpop.f32.mrb[0].mxu0
        %v2900 = vpop.f32.mrb[0].mxu0
        %2901 = vdwg.mxu0
        %2902 = vmatprep.subr.bf16.mxu0 %v2670
        %2903 = vmatpush1.bf16.msra.mxu0 %v2669
        %2904 = vmatprep.subr.bf16.mxu0 %v2674
        %2905 = vmatpush1.bf16.msra.mxu0 %v2673
        %2906 = vmatprep.subr.bf16.mxu0 %v2678
        %2907 = vmatpush1.bf16.msra.mxu0 %v2677
        %2908 = vmatprep.subr.bf16.mxu0 %v2682
        %2909 = vmatpush1.bf16.msra.mxu0 %v2681
        %2910 = vmatprep.subr.bf16.mxu0 %v2686
        %2911 = vmatpush1.bf16.msra.mxu0 %v2685
        %2912 = vmatprep.subr.bf16.mxu0 %v2690
        %2913 = vmatpush1.bf16.msra.mxu0 %v2689
        %2914 = vmatprep.subr.bf16.mxu0 %v2694
        %2915 = vmatpush1.bf16.msra.mxu0 %v2693
        %2916 = vmatprep.subr.bf16.mxu0 %v2698
        %2917 = vmatpush1.bf16.msra.mxu0 %v2697
        %2918 = vmatprep.subr.bf16.mxu0 %v2702
        %2919 = vmatpush1.bf16.msra.mxu0 %v2701
        %2920 = vmatprep.subr.bf16.mxu0 %v2706
        %2921 = vmatpush1.bf16.msra.mxu0 %v2705
        %2922 = vmatprep.subr.bf16.mxu0 %v2710
        %2923 = vmatpush1.bf16.msra.mxu0 %v2709
        %2924 = vmatprep.subr.bf16.mxu0 %v2714
        %2925 = vmatpush1.bf16.msra.mxu0 %v2713
        %2926 = vmatprep.subr.bf16.mxu0 %v2718
        %2927 = vmatpush1.bf16.msra.mxu0 %v2717
        %2928 = vmatprep.subr.bf16.mxu0 %v2722
        %2929 = vmatpush1.bf16.msra.mxu0 %v2721
        %2930 = vmatprep.subr.bf16.mxu0 %v2726
        %2931 = vmatpush1.bf16.msra.mxu0 %v2725
        %2932 = vmatprep.subr.bf16.mxu0 %v2730
        %2933 = vmatpush1.bf16.msra.mxu0 %v2729
        %2934 = vmatprep.mubr.bf16.mxu0 %v2070
        %2935 = vmatmul.mubr.bf16.gmra.mrb[0].mxu0 %v2069
        %v2936 = vpop.f32.mrb[0].mxu0
        %v2937 = vadd.f32 %v2896, %v2936
        %v2938 = vpop.f32.mrb[0].mxu0
        %v2939 = vadd.f32 %v2898, %v2938
        %v2940 = vpop.f32.mrb[0].mxu0
        %v2941 = vpop.f32.mrb[0].mxu0
        %2942 = vdwg.mxu0
        %2943 = vmatprep.subr.bf16.mxu0 %v2608
        %2944 = vmatpush1.bf16.msra.mxu0 %v2607
        %2945 = vmatprep.subr.bf16.mxu0 %v2612
        %2946 = vmatpush1.bf16.msra.mxu0 %v2611
        %2947 = vmatprep.subr.bf16.mxu0 %v2616
        %2948 = vmatpush1.bf16.msra.mxu0 %v2615
        %2949 = vmatprep.subr.bf16.mxu0 %v2620
        %2950 = vmatpush1.bf16.msra.mxu0 %v2619
        %2951 = vmatprep.subr.bf16.mxu0 %v2624
        %2952 = vmatpush1.bf16.msra.mxu0 %v2623
        %2953 = vmatprep.subr.bf16.mxu0 %v2628
        %2954 = vmatpush1.bf16.msra.mxu0 %v2627
        %2955 = vmatprep.subr.bf16.mxu0 %v2632
        %2956 = vmatpush1.bf16.msra.mxu0 %v2631
        %2957 = vmatprep.subr.bf16.mxu0 %v2636
        %2958 = vmatpush1.bf16.msra.mxu0 %v2635
        %2959 = vmatprep.subr.bf16.mxu0 %v2640
        %2960 = vmatpush1.bf16.msra.mxu0 %v2639
        %2961 = vmatprep.subr.bf16.mxu0 %v2644
        %2962 = vmatpush1.bf16.msra.mxu0 %v2643
        %2963 = vmatprep.subr.bf16.mxu0 %v2648
        %2964 = vmatpush1.bf16.msra.mxu0 %v2647
        %2965 = vmatprep.subr.bf16.mxu0 %v2652
        %2966 = vmatpush1.bf16.msra.mxu0 %v2651
        %2967 = vmatprep.subr.bf16.mxu0 %v2656
        %2968 = vmatpush1.bf16.msra.mxu0 %v2655
        %2969 = vmatprep.subr.bf16.mxu0 %v2660
        %2970 = vmatpush1.bf16.msra.mxu0 %v2659
        %2971 = vmatprep.subr.bf16.mxu0 %v2664
        %2972 = vmatpush1.bf16.msra.mxu0 %v2663
        %2973 = vmatprep.subr.bf16.mxu0 %v2668
        %2974 = vmatpush1.bf16.msra.mxu0 %v2667
        %2975 = vmatprep.mubr.bf16.mxu0 %v2068
        %2976 = vmatmul.mubr.bf16.gmra.mrb[0].mxu0 %v2067
        %v2977 = vpop.f32.mrb[0].mxu0
        %v2978 = vadd.f32 %v2212, %v2977
        %v2979 = vpop.f32.mrb[0].mxu0
        %v2980 = vadd.f32 %v2216, %v2979
        %v2981 = vpop.f32.mrb[0].mxu0
        %v2982 = vpop.f32.mrb[0].mxu0
        %2983 = vdwg.mxu0
        %2984 = vmatprep.subr.bf16.mxu0 %v2672
        %2985 = vmatpush1.bf16.msra.mxu0 %v2671
        %2986 = vmatprep.subr.bf16.mxu0 %v2676
        %2987 = vmatpush1.bf16.msra.mxu0 %v2675
        %2988 = vmatprep.subr.bf16.mxu0 %v2680
        %2989 = vmatpush1.bf16.msra.mxu0 %v2679
        %2990 = vmatprep.subr.bf16.mxu0 %v2684
        %2991 = vmatpush1.bf16.msra.mxu0 %v2683
        %2992 = vmatprep.subr.bf16.mxu0 %v2688
        %2993 = vmatpush1.bf16.msra.mxu0 %v2687
        %2994 = vmatprep.subr.bf16.mxu0 %v2692
        %2995 = vmatpush1.bf16.msra.mxu0 %v2691
        %2996 = vmatprep.subr.bf16.mxu0 %v2696
        %2997 = vmatpush1.bf16.msra.mxu0 %v2695
        %2998 = vmatprep.subr.bf16.mxu0 %v2700
        %2999 = vmatpush1.bf16.msra.mxu0 %v2699
        %3000 = vmatprep.subr.bf16.mxu0 %v2704
        %3001 = vmatpush1.bf16.msra.mxu0 %v2703
        %3002 = vmatprep.subr.bf16.mxu0 %v2708
        %3003 = vmatpush1.bf16.msra.mxu0 %v2707
        %3004 = vmatprep.subr.bf16.mxu0 %v2712
        %3005 = vmatpush1.bf16.msra.mxu0 %v2711
        %3006 = vmatprep.subr.bf16.mxu0 %v2716
        %3007 = vmatpush1.bf16.msra.mxu0 %v2715
        %3008 = vmatprep.subr.bf16.mxu0 %v2720
        %3009 = vmatpush1.bf16.msra.mxu0 %v2719
        %3010 = vmatprep.subr.bf16.mxu0 %v2724
        %3011 = vmatpush1.bf16.msra.mxu0 %v2723
        %3012 = vmatprep.subr.bf16.mxu0 %v2728
        %3013 = vmatpush1.bf16.msra.mxu0 %v2727
        %3014 = vmatprep.subr.bf16.mxu0 %v2732
        %3015 = vmatpush1.bf16.msra.mxu0 %v2731
        %3016 = vmatprep.mubr.bf16.mxu0 %v2070
        %3017 = vmatmul.mubr.bf16.gmra.mrb[0].mxu0 %v2069
        %v3018 = vpop.f32.mrb[0].mxu0
        %v3019 = vadd.f32 %v2978, %v3018
        %v3020 = vpop.f32.mrb[0].mxu0
        %v3021 = vadd.f32 %v2980, %v3020
        %v3022 = vpop.f32.mrb[0].mxu0
        %v3023 = vpop.f32.mrb[0].mxu0
        %3024 = vdwg.mxu0
        %v3025 = vmax.f32 %v2937, 0.0
        %v3026 = vmax.f32 %v2939, 0.0
        %v3027 = vmax.f32 %v3019, 0.0
        %v3028 = vmax.f32 %v3021, 0.0
        %v3029 = vpack.c.bf16 %v3025, %v3025
        %v3030 = vpack.c.bf16 %v3026, %v3026
        %v3031 = vpack.c.bf16 %v3027, %v3027
        %v3032 = vpack.c.bf16 %v3028, %v3028
        %v3033 = vld [vmem:[#allocation8] sm:$0xf]
        %v3034 = vld [vmem:[#allocation8 + $0x4] sm:$0xf]
        %v3035 = vld [vmem:[#allocation8 + $0x8] sm:$0xf]
        %v3036 = vld [vmem:[#allocation8 + $0xc] sm:$0xf]
        %v3037 = vld [vmem:[#allocation8 + $0x10] sm:$0xf]
        %v3038 = vld [vmem:[#allocation8 + $0x14] sm:$0xf]
        %v3039 = vld [vmem:[#allocation8 + $0x18] sm:$0xf]
        %v3040 = vld [vmem:[#allocation8 + $0x1c] sm:$0xf]
        %v3041 = vld [vmem:[#allocation8 + $0x20] sm:$0xf]
        %v3042 = vld [vmem:[#allocation8 + $0x24] sm:$0xf]
        %v3043 = vld [vmem:[#allocation8 + $0x28] sm:$0xf]
        %v3044 = vld [vmem:[#allocation8 + $0x2c] sm:$0xf]
        %v3045 = vld [vmem:[#allocation8 + $0x30] sm:$0xf]
        %v3046 = vld [vmem:[#allocation8 + $0x34] sm:$0xf]
        %v3047 = vld [vmem:[#allocation8 + $0x38] sm:$0xf]
        %v3048 = vld [vmem:[#allocation8 + $0x3c] sm:$0xf]
        %v3049 = vld [vmem:[#allocation8 + $0x40] sm:$0xf]
        %v3050 = vld [vmem:[#allocation8 + $0x44] sm:$0xf]
        %v3051 = vld [vmem:[#allocation8 + $0x48] sm:$0xf]
        %v3052 = vld [vmem:[#allocation8 + $0x4c] sm:$0xf]
        %v3053 = vld [vmem:[#allocation8 + $0x50] sm:$0xf]
        %v3054 = vld [vmem:[#allocation8 + $0x54] sm:$0xf]
        %v3055 = vld [vmem:[#allocation8 + $0x58] sm:$0xf]
        %v3056 = vld [vmem:[#allocation8 + $0x5c] sm:$0xf]
        %v3057 = vld [vmem:[#allocation8 + $0x60] sm:$0xf]
        %v3058 = vld [vmem:[#allocation8 + $0x64] sm:$0xf]
        %v3059 = vld [vmem:[#allocation8 + $0x68] sm:$0xf]
        %v3060 = vld [vmem:[#allocation8 + $0x6c] sm:$0xf]
        %v3061 = vld [vmem:[#allocation8 + $0x70] sm:$0xf]
        %v3062 = vld [vmem:[#allocation8 + $0x74] sm:$0xf]
        %v3063 = vld [vmem:[#allocation8 + $0x78] sm:$0xf]
        %v3064 = vld [vmem:[#allocation8 + $0x7c] sm:$0xf]
        %v3065 = vld [vmem:[#allocation8 + $0x80] sm:$0xf]
        %v3066 = vld [vmem:[#allocation8 + $0x84] sm:$0xf]
        %v3067 = vld [vmem:[#allocation8 + $0x88] sm:$0xf]
        %v3068 = vld [vmem:[#allocation8 + $0x8c] sm:$0xf]
        %v3069 = vld [vmem:[#allocation8 + $0x90] sm:$0xf]
        %v3070 = vld [vmem:[#allocation8 + $0x94] sm:$0xf]
        %v3071 = vld [vmem:[#allocation8 + $0x98] sm:$0xf]
        %v3072 = vld [vmem:[#allocation8 + $0x9c] sm:$0xf]
        %v3073 = vld [vmem:[#allocation8 + $0xa0] sm:$0xf]
        %v3074 = vld [vmem:[#allocation8 + $0xa4] sm:$0xf]
        %v3075 = vld [vmem:[#allocation8 + $0xa8] sm:$0xf]
        %v3076 = vld [vmem:[#allocation8 + $0xac] sm:$0xf]
        %v3077 = vld [vmem:[#allocation8 + $0xb0] sm:$0xf]
        %v3078 = vld [vmem:[#allocation8 + $0xb4] sm:$0xf]
        %v3079 = vld [vmem:[#allocation8 + $0xb8] sm:$0xf]
        %v3080 = vld [vmem:[#allocation8 + $0xbc] sm:$0xf]
        %v3081 = vld [vmem:[#allocation8 + $0xc0] sm:$0xf]
        %v3082 = vld [vmem:[#allocation8 + $0xc4] sm:$0xf]
        %v3083 = vld [vmem:[#allocation8 + $0xc8] sm:$0xf]
        %v3084 = vld [vmem:[#allocation8 + $0xcc] sm:$0xf]
        %v3085 = vld [vmem:[#allocation8 + $0xd0] sm:$0xf]
        %v3086 = vld [vmem:[#allocation8 + $0xd4] sm:$0xf]
        %v3087 = vld [vmem:[#allocation8 + $0xd8] sm:$0xf]
        %v3088 = vld [vmem:[#allocation8 + $0xdc] sm:$0xf]
        %v3089 = vld [vmem:[#allocation8 + $0xe0] sm:$0xf]
        %v3090 = vld [vmem:[#allocation8 + $0xe4] sm:$0xf]
        %v3091 = vld [vmem:[#allocation8 + $0xe8] sm:$0xf]
        %v3092 = vld [vmem:[#allocation8 + $0xec] sm:$0xf]
        %v3093 = vld [vmem:[#allocation8 + $0xf0] sm:$0xf]
        %v3094 = vld [vmem:[#allocation8 + $0xf4] sm:$0xf]
        %v3095 = vld [vmem:[#allocation8 + $0xf8] sm:$0xf]
        %v3096 = vld [vmem:[#allocation8 + $0xfc] sm:$0xf]
        %v3097 = vld [vmem:[%s6] sm:$0x1]
        %v3099 = vlaneseq
        %v3100 = vshrl.u32 %v3099, 7
        %v3101 = vsub.s32 0, %v3100
        %v3102 = vrot.slane %v3097, %v3101
        %v3168 = vunpack.c.l.b16 %v3033
        %v3169 = vunpack.c.l.b16 %v3034
        %v3170 = vunpack.c.l.b16 %v3035
        %v3171 = vunpack.c.l.b16 %v3036
        %v3172 = vunpack.c.l.b16 %v3037
        %v3173 = vunpack.c.l.b16 %v3038
        %v3174 = vunpack.c.l.b16 %v3039
        %v3175 = vunpack.c.l.b16 %v3040
        %v3176 = vunpack.c.l.b16 %v3041
        %v3177 = vunpack.c.l.b16 %v3042
        %v3178 = vunpack.c.l.b16 %v3043
        %v3179 = vunpack.c.l.b16 %v3044
        %v3180 = vunpack.c.l.b16 %v3045
        %v3181 = vunpack.c.l.b16 %v3046
        %v3182 = vunpack.c.l.b16 %v3047
        %v3183 = vunpack.c.l.b16 %v3048
        %v3184 = vunpack.c.l.b16 %v3049
        %v3185 = vunpack.c.l.b16 %v3050
        %v3186 = vunpack.c.l.b16 %v3051
        %v3187 = vunpack.c.l.b16 %v3052
        %v3188 = vunpack.c.l.b16 %v3053
        %v3189 = vunpack.c.l.b16 %v3054
        %v3190 = vunpack.c.l.b16 %v3055
        %v3191 = vunpack.c.l.b16 %v3056
        %v3192 = vunpack.c.l.b16 %v3057
        %v3193 = vunpack.c.l.b16 %v3058
        %v3194 = vunpack.c.l.b16 %v3059
        %v3195 = vunpack.c.l.b16 %v3060
        %v3196 = vunpack.c.l.b16 %v3061
        %v3197 = vunpack.c.l.b16 %v3062
        %v3198 = vunpack.c.l.b16 %v3063
        %v3199 = vunpack.c.l.b16 %v3064
        %v3200 = vunpack.c.l.b16 %v3065
        %v3201 = vunpack.c.l.b16 %v3066
        %v3202 = vunpack.c.l.b16 %v3067
        %v3203 = vunpack.c.l.b16 %v3068
        %v3204 = vunpack.c.l.b16 %v3069
        %v3205 = vunpack.c.l.b16 %v3070
        %v3206 = vunpack.c.l.b16 %v3071
        %v3207 = vunpack.c.l.b16 %v3072
        %v3208 = vunpack.c.l.b16 %v3073
        %v3209 = vunpack.c.l.b16 %v3074
        %v3210 = vunpack.c.l.b16 %v3075
        %v3211 = vunpack.c.l.b16 %v3076
        %v3212 = vunpack.c.l.b16 %v3077
        %v3213 = vunpack.c.l.b16 %v3078
        %v3214 = vunpack.c.l.b16 %v3079
        %v3215 = vunpack.c.l.b16 %v3080
        %v3216 = vunpack.c.l.b16 %v3081
        %v3217 = vunpack.c.l.b16 %v3082
        %v3218 = vunpack.c.l.b16 %v3083
        %v3219 = vunpack.c.l.b16 %v3084
        %v3220 = vunpack.c.l.b16 %v3085
        %v3221 = vunpack.c.l.b16 %v3086
        %v3222 = vunpack.c.l.b16 %v3087
        %v3223 = vunpack.c.l.b16 %v3088
        %v3224 = vunpack.c.l.b16 %v3089
        %v3225 = vunpack.c.l.b16 %v3090
        %v3226 = vunpack.c.l.b16 %v3091
        %v3227 = vunpack.c.l.b16 %v3092
        %v3228 = vunpack.c.l.b16 %v3093
        %v3229 = vunpack.c.l.b16 %v3094
        %v3230 = vunpack.c.l.b16 %v3095
        %v3231 = vunpack.c.l.b16 %v3096
        %v3232 = vpack.c.b16 %v3169, %v3168
        %v3233 = vpack.c.b16 %v3171, %v3170
        %v3234 = vpack.c.b16 %v3173, %v3172
        %v3235 = vpack.c.b16 %v3175, %v3174
        %v3236 = vpack.c.b16 %v3177, %v3176
        %v3237 = vpack.c.b16 %v3179, %v3178
        %v3238 = vpack.c.b16 %v3181, %v3180
        %v3239 = vpack.c.b16 %v3183, %v3182
        %v3240 = vpack.c.b16 %v3185, %v3184
        %v3241 = vpack.c.b16 %v3187, %v3186
        %v3242 = vpack.c.b16 %v3189, %v3188
        %v3243 = vpack.c.b16 %v3191, %v3190
        %v3244 = vpack.c.b16 %v3193, %v3192
        %v3245 = vpack.c.b16 %v3195, %v3194
        %v3246 = vpack.c.b16 %v3197, %v3196
        %v3247 = vpack.c.b16 %v3199, %v3198
        %v3248 = vpack.c.b16 %v3201, %v3200
        %v3249 = vpack.c.b16 %v3203, %v3202
        %v3250 = vpack.c.b16 %v3205, %v3204
        %v3251 = vpack.c.b16 %v3207, %v3206
        %v3252 = vpack.c.b16 %v3209, %v3208
        %v3253 = vpack.c.b16 %v3211, %v3210
        %v3254 = vpack.c.b16 %v3213, %v3212
        %v3255 = vpack.c.b16 %v3215, %v3214
        %v3256 = vpack.c.b16 %v3217, %v3216
        %v3257 = vpack.c.b16 %v3219, %v3218
        %v3258 = vpack.c.b16 %v3221, %v3220
        %v3259 = vpack.c.b16 %v3223, %v3222
        %v3260 = vpack.c.b16 %v3225, %v3224
        %v3261 = vpack.c.b16 %v3227, %v3226
        %v3262 = vpack.c.b16 %v3229, %v3228
        %v3263 = vpack.c.b16 %v3231, %v3230
        %3296 = vmatprep.subr.bf16.mxu0 0
        %3297 = vmatpush1.bf16.msra.mxu0 %v3232
        %3298 = vmatprep.subr.bf16.mxu0 0
        %3299 = vmatpush1.bf16.msra.mxu0 %v3233
        %3300 = vmatprep.subr.bf16.mxu0 0
        %3301 = vmatpush1.bf16.msra.mxu0 %v3234
        %3302 = vmatprep.subr.bf16.mxu0 0
        %3303 = vmatpush1.bf16.msra.mxu0 %v3235
        %3304 = vmatprep.subr.bf16.mxu0 0
        %3305 = vmatpush1.bf16.msra.mxu0 %v3236
        %3306 = vmatprep.subr.bf16.mxu0 0
        %3307 = vmatpush1.bf16.msra.mxu0 %v3237
        %3308 = vmatprep.subr.bf16.mxu0 0
        %3309 = vmatpush1.bf16.msra.mxu0 %v3238
        %3310 = vmatprep.subr.bf16.mxu0 0
        %3311 = vmatpush1.bf16.msra.mxu0 %v3239
        %3312 = vmatprep.subr.bf16.mxu0 0
        %3313 = vmatpush1.bf16.msra.mxu0 %v3240
        %3314 = vmatprep.subr.bf16.mxu0 0
        %3315 = vmatpush1.bf16.msra.mxu0 %v3241
        %3316 = vmatprep.subr.bf16.mxu0 0
        %3317 = vmatpush1.bf16.msra.mxu0 %v3242
        %3318 = vmatprep.subr.bf16.mxu0 0
        %3319 = vmatpush1.bf16.msra.mxu0 %v3243
        %3320 = vmatprep.subr.bf16.mxu0 0
        %3321 = vmatpush1.bf16.msra.mxu0 %v3244
        %3322 = vmatprep.subr.bf16.mxu0 0
        %3323 = vmatpush1.bf16.msra.mxu0 %v3245
        %3324 = vmatprep.subr.bf16.mxu0 0
        %3325 = vmatpush1.bf16.msra.mxu0 %v3246
        %3326 = vmatprep.subr.bf16.mxu0 0
        %3327 = vmatpush1.bf16.msra.mxu0 %v3247
        %3328 = vmatprep.mubr.bf16.mxu0 %v3030
        %3329 = vmatmul.mubr.bf16.gmra.mrb[0].mxu0 %v3029
        %v3330 = vpop.f32.mrb[0].mxu0
        %v3331 = vadd.f32 %v3102, %v3330
        %v3332 = vpop.f32.mrb[0].mxu0
        %v3333 = vpop.f32.mrb[0].mxu0
        %v3334 = vpop.f32.mrb[0].mxu0
        %3335 = vdwg.mxu0
        %3336 = vmatprep.subr.bf16.mxu0 0
        %3337 = vmatpush1.bf16.msra.mxu0 %v3248
        %3338 = vmatprep.subr.bf16.mxu0 0
        %3339 = vmatpush1.bf16.msra.mxu0 %v3249
        %3340 = vmatprep.subr.bf16.mxu0 0
        %3341 = vmatpush1.bf16.msra.mxu0 %v3250
        %3342 = vmatprep.subr.bf16.mxu0 0
        %3343 = vmatpush1.bf16.msra.mxu0 %v3251
        %3344 = vmatprep.subr.bf16.mxu0 0
        %3345 = vmatpush1.bf16.msra.mxu0 %v3252
        %3346 = vmatprep.subr.bf16.mxu0 0
        %3347 = vmatpush1.bf16.msra.mxu0 %v3253
        %3348 = vmatprep.subr.bf16.mxu0 0
        %3349 = vmatpush1.bf16.msra.mxu0 %v3254
        %3350 = vmatprep.subr.bf16.mxu0 0
        %3351 = vmatpush1.bf16.msra.mxu0 %v3255
        %3352 = vmatprep.subr.bf16.mxu0 0
        %3353 = vmatpush1.bf16.msra.mxu0 %v3256
        %3354 = vmatprep.subr.bf16.mxu0 0
        %3355 = vmatpush1.bf16.msra.mxu0 %v3257
        %3356 = vmatprep.subr.bf16.mxu0 0
        %3357 = vmatpush1.bf16.msra.mxu0 %v3258
        %3358 = vmatprep.subr.bf16.mxu0 0
        %3359 = vmatpush1.bf16.msra.mxu0 %v3259
        %3360 = vmatprep.subr.bf16.mxu0 0
        %3361 = vmatpush1.bf16.msra.mxu0 %v3260
        %3362 = vmatprep.subr.bf16.mxu0 0
        %3363 = vmatpush1.bf16.msra.mxu0 %v3261
        %3364 = vmatprep.subr.bf16.mxu0 0
        %3365 = vmatpush1.bf16.msra.mxu0 %v3262
        %3366 = vmatprep.subr.bf16.mxu0 0
        %3367 = vmatpush1.bf16.msra.mxu0 %v3263
        %3368 = vmatprep.mubr.bf16.mxu0 %v3032
        %3369 = vmatmul.mubr.bf16.gmra.mrb[0].mxu0 %v3031
        %v3370 = vpop.f32.mrb[0].mxu0
        %v3371 = vadd.f32 %v3331, %v3370
        %v3372 = vpop.f32.mrb[0].mxu0
        %v3373 = vpop.f32.mrb[0].mxu0
        %v3374 = vpop.f32.mrb[0].mxu0
        %3375 = vdwg.mxu0
        %3376 = vst [vmem:[%s338] sm:$0xff] %v3371
        %s3377 = sand.u32 %s186, 1
        %s3378 = scalar_lea.sflag [#allocation4], %s3377
        %s3379 = sand.u32 %s186, 1
        %s3380 = smul.addr %s3379, 8
        %s3381 = scalar_lea.vmem [#allocation10], %s3380
        // Predicated region
        $region65: #{tpu_custom_call.1} parent=47 // pred_check
          %p3382 = pneg %p196
        $region66: #{tpu_custom_call.1} parent=47 // pred_check_branch
          %3384 = sbr.rel (%p3382) target = $region68
        $region67: #{tpu_custom_call.1} parent=47 // pred_region
          %s3386 = ssub.s32 128, 128
          %3387 = vsyncadd %s3378, %s3386
          %s3388 = smul.addr %s26, 128
          %s3389 = scalar_lea.hbm %s7, %s3388
          %s3391 = sshll.u32 %s3381, 4
          %s3392 = int_to_ptr.vmem [resolvable:$true] %s3391
          %3394 = dma.vmem_to_hbm [thread:$0]  %s3392, 128, %s3389, %s3378
        $region68: #{tpu_custom_call.1} parent=47 // pred_fallthru
          _
      $region48: #{tpu_custom_call.1} parent=5 // pred_fallthru
        _
      %p3395 = scmp.le.s32.totalorder 2, %s21
      // Predicated region
      $region69: #{tpu_custom_call.1} parent=5 // pred_check
        %p3396 = pneg %p3395
      $region70: #{tpu_custom_call.1} parent=5 // pred_check_branch
        %3398 = sbr.rel (%p3396) target = $region72
      $region71: #{tpu_custom_call.1} parent=5 // pred_region
        %s3399 = ssub.s32 %s21, 2
        // Predicated region
        $region73: #{tpu_custom_call.1} parent=71 // pred_check
          %p3400 = pneg %p202
        $region74: #{tpu_custom_call.1} parent=71 // pred_check_branch
          %3402 = sbr.rel (%p3400) target = $region76
        $region75: #{tpu_custom_call.1} parent=71 // pred_region
          %s3403 = sand.u32 %s187, 1
          %s3404 = scalar_lea.sflag [#allocation4], %s3403
          %s3405 = sand.u32 %s187, 1
          %s3406 = smul.addr %s3405, 8
          %s3407 = scalar_lea.vmem [#allocation10], %s3406
          %3408 = dma.done %s3404, 128
        $region76: #{tpu_custom_call.1} parent=71 // pred_fallthru
          _
      $region72: #{tpu_custom_call.1} parent=5 // pred_fallthru
        _
    $region6: #{tpu_custom_call.1} parent=1 // loop_footer
      %s25 = sadd.s32 1, %s21
    $region7: #{tpu_custom_call.1} parent=1 // loop_footer_branch
      %20 = sbr.rel target = $region3
    $region8: #{tpu_custom_call.1} parent=1 // loop_exit
      _
    %3409 = vsyncpa [#allocation3], 1
    %s3410 = scalar_lea.sflag [#allocation3], 1
    %3411 = vsyncpa %s3410, 1
    %3412 = vsyncpa [#allocation6], 1
    %3413 = vsyncpa [#allocation9], 1
    %3414 = vsyncpa [#allocation4], 1
    %s3415 = scalar_lea.sflag [#allocation4], 1
    %3416 = vsyncpa %s3415, 1

</llo_original>
